<compile_context>
chip_gen: v5e
topology: v5e:2x2
jax: 0.10.0
libtpu: 0.0.40
codegen_flags: <defaults>
</compile_context>

<pallas_src>
import functools

import jax
import jax.numpy as jnp
from jax.experimental import pallas as pl

# ----------------------------- small config ---------------------------------
INPUT_SIZE = 32          # embed dim E
NUM_NUCLEOTIDES = 4
SEQ_LEN = 8
NUM_HEADS = 2
MLP_FACTOR = 2
NUM_UNITS = 2
NUM_CLASSES = 2
BATCH = 2
LN_EPS = 1e-5


# ------------------------------ kernel utils --------------------------------
def _softmax_last(a):
    m = jnp.max(a, axis=-1, keepdims=True)
    e = jnp.exp(a - m)
    return e / jnp.sum(e, axis=-1, keepdims=True)


def _layer_norm(v, gamma, beta):
    mu = jnp.mean(v, axis=-1, keepdims=True)
    var = jnp.mean((v - mu) ** 2, axis=-1, keepdims=True)
    return (v - mu) / jnp.sqrt(var + LN_EPS) * gamma + beta


# ------------------------- fully fused forward kernel ------------------------
def fused_forward_kernel(tok_ref, nuc_ref, pos_ref,
                         wqkv_ref, wz_ref, bz_ref, ln1g_ref, ln1b_ref,
                         w1_ref, b1_ref, w2_ref, b2_ref, ln2g_ref, ln2b_ref,
                         qv_ref, wy_ref, by_ref,
                         logp_ref, fattn_ref, attn_ref,
                         *, batch, seq, embed, heads, units):
    B, S, E, H, U = batch, seq, embed, heads, units
    N = B * S
    HE = H * E
    inv_sqrt_e = 1.0 / (float(E) ** 0.5)

    # ---- NucleoPosEmbedder: one-hot (N,4)@(4,E) matmul + positional add -----
    ids = tok_ref[...]                                             # (N, 1) i32
    iota = jax.lax.broadcasted_iota(jnp.int32, (N, NUM_NUCLEOTIDES), 1)
    onehot = (ids == iota).astype(jnp.float32)                     # (N, 4)
    x = jnp.dot(onehot, nuc_ref[...], preferred_element_type=jnp.float32)
    x = x + jnp.concatenate([pos_ref[...]] * B, axis=0)            # (N, E)

    attn_acc = [jnp.zeros((S, S), jnp.float32) for _ in range(B)]

    # ---- transformer units (statically unrolled) -----------------------------
    for u in range(U):
        # fused QKV for all heads in one matmul: (N, E) @ (E, 3*H*E)
        qkv = jnp.dot(x, wqkv_ref[u], preferred_element_type=jnp.float32)
        z_rows = []
        for b in range(B):
            r = slice(b * S, (b + 1) * S)
            z_heads = []
            for h in range(H):
                q = qkv[r, h * E:(h + 1) * E]                      # (S, E)
                k = qkv[r, HE + h * E:HE + (h + 1) * E]            # (S, E)
                v = qkv[r, 2 * HE + h * E:2 * HE + (h + 1) * E]    # (S, E)
                logits = jax.lax.dot_general(
                    q, k, (((1,), (1,)), ((), ())),
                    preferred_element_type=jnp.float32) * inv_sqrt_e   # (S, S)
                aw = _softmax_last(logits)
                attn_acc[b] = attn_acc[b] + aw
                z_heads.append(
                    jnp.dot(aw, v, preferred_element_type=jnp.float32))
            z_rows.append(jnp.concatenate(z_heads, axis=-1))       # (S, H*E)
        z_cat = jnp.concatenate(z_rows, axis=0)                    # (N, H*E)

        # combined head projection (single matmul) + bias
        z = jnp.dot(z_cat, wz_ref[u],
                    preferred_element_type=jnp.float32) + bz_ref[u]
        z = _layer_norm(z + x, ln1g_ref[u], ln1b_ref[u])
        # dropout: identity (eval mode)

        h1 = jnp.dot(z, w1_ref[u],
                     preferred_element_type=jnp.float32) + b1_ref[u]
        h1 = jnp.maximum(h1, 0.0)                                  # ReLU
        z_ff = jnp.dot(h1, w2_ref[u],
                       preferred_element_type=jnp.float32) + b2_ref[u]
        x = _layer_norm(z_ff + z, ln2g_ref[u], ln2b_ref[u])
        # dropout: identity (eval mode)

    # ---- attention tensor: mean over (units x heads), accumulated on-chip ----
    inv_uh = 1.0 / float(U * H)
    for b in range(B):
        attn_ref[b] = attn_acc[b] * inv_uh

    # ---- FeatureEmbAttention pooling + classifier + log_softmax --------------
    qv = qv_ref[...]                                               # (1, E)
    pooled_rows = []
    fattn_rows = []
    for b in range(B):
        zb = x[b * S:(b + 1) * S, :]                               # (S, E)
        logits = jax.lax.dot_general(
            qv, zb, (((1,), (1,)), ((), ())),
            preferred_element_type=jnp.float32) * inv_sqrt_e       # (1, S)
        aw = _softmax_last(logits)                                 # softmax/seq
        fattn_rows.append(aw)
        pooled_rows.append(jnp.dot(aw, zb,
                                   preferred_element_type=jnp.float32))
    fattn_ref[...] = jnp.concatenate(fattn_rows, axis=0)           # (B, S)
    pooled = jnp.concatenate(pooled_rows, axis=0)                  # (B, E)

    y = jnp.dot(pooled, wy_ref[...],
                preferred_element_type=jnp.float32) + by_ref[...]  # (B, C)
    m = jnp.max(y, axis=-1, keepdims=True)
    lse = m + jnp.log(jnp.sum(jnp.exp(y - m), axis=-1, keepdims=True))
    logp_ref[...] = y - lse


# ------------------------------- full forward -------------------------------
def categ_criscas_forward(X_tokens, params):
    """X_tokens: (B, S) int32 -> (log_softmax(y), fattn_w_norm, attn_tensor)."""
    B, S = X_tokens.shape
    E, H, U = INPUT_SIZE, NUM_HEADS, NUM_UNITS
    C = params["wy"].shape[1]
    tok = X_tokens.reshape(B * S, 1).astype(jnp.int32)

    kernel = functools.partial(
        fused_forward_kernel, batch=B, seq=S, embed=E, heads=H, units=U)

    out_shape = [
        jax.ShapeDtypeStruct((B, C), jnp.float32),
        jax.ShapeDtypeStruct((B, S), jnp.float32),
        jax.ShapeDtypeStruct((B, S, S), jnp.float32),
    ]
    # Single invocation, whole arrays resident in VMEM (default full-array
    # BlockSpecs); total footprint is far below the scoped VMEM limit on
    # v5e / v6e / v7x, so no blocking / grid axes are needed.
    log_probs, fattn, attn_tensor = pl.pallas_call(
        kernel, out_shape=out_shape,
    )(tok, params["nucleo_emb"], params["pos_emb"],
      params["wqkv"], params["wz"], params["bz"],
      params["ln1_g"], params["ln1_b"],
      params["w1"], params["b1"], params["w2"], params["b2"],
      params["ln2_g"], params["ln2_b"],
      params["queryv"], params["wy"], params["by"])
    return log_probs, fattn, attn_tensor


# ------------------------------ parameter init ------------------------------
def _xavier(key, shape):
    fan_in, fan_out = shape[-2], shape[-1]
    lim = (6.0 / (fan_in + fan_out)) ** 0.5
    return jax.random.uniform(key, shape, jnp.float32, -lim, lim)


def init_params(key):
    keys = iter(jax.random.split(key, 64))
    E, H, F, S, C, U = (INPUT_SIZE, NUM_HEADS, INPUT_SIZE * MLP_FACTOR,
                        SEQ_LEN, NUM_CLASSES, NUM_UNITS)

    def stack_heads(w):  # (U, H, E, E) -> (U, E, H*E): concat heads on columns
        return jnp.transpose(w, (0, 2, 1, 3)).reshape(U, E, H * E)

    wq = _xavier(next(keys), (U, H, E, E))
    wk = _xavier(next(keys), (U, H, E, E))
    wv = _xavier(next(keys), (U, H, E, E))

    params = {
        "nucleo_emb": _xavier(next(keys), (NUM_NUCLEOTIDES, E)),
        "pos_emb": _xavier(next(keys), (S, E)),
        # fused QKV weight: columns = [Q heads | K heads | V heads]
        "wqkv": jnp.concatenate(
            [stack_heads(wq), stack_heads(wk), stack_heads(wv)], axis=-1),
        "wz": _xavier(next(keys), (U, H * E, E)),
        "bz": jax.random.uniform(next(keys), (U, 1, E), jnp.float32, -1.0, 1.0),
        "ln1_g": jnp.ones((U, 1, E), jnp.float32),
        "ln1_b": jax.random.uniform(next(keys), (U, 1, E), jnp.float32, -1.0, 1.0),
        "w1": _xavier(next(keys), (U, E, F)),
        "b1": jax.random.uniform(next(keys), (U, 1, F), jnp.float32, -1.0, 1.0),
        "w2": _xavier(next(keys), (U, F, E)),
        "b2": jax.random.uniform(next(keys), (U, 1, E), jnp.float32, -1.0, 1.0),
        "ln2_g": jnp.ones((U, 1, E), jnp.float32),
        "ln2_b": jax.random.uniform(next(keys), (U, 1, E), jnp.float32, -1.0, 1.0),
        "queryv": jax.random.normal(next(keys), (1, E), jnp.float32),
        "wy": _xavier(next(keys), (E, C)),
        "by": jax.random.uniform(next(keys), (1, C), jnp.float32, -1.0, 1.0),
    }
    return params


# ----------------------------------- main ------------------------------------
if __name__ == "__main__":
    key = jax.random.PRNGKey(0)
    pkey, xkey = jax.random.split(key)
    params = init_params(pkey)

    X = jax.random.randint(xkey, (BATCH, SEQ_LEN), 0, NUM_NUCLEOTIDES,
                           dtype=jnp.int32)

    fwd = jax.jit(categ_criscas_forward)
    log_probs, fattn, attn_tensor = fwd(X, params)
    jax.block_until_ready((log_probs, fattn, attn_tensor))

    assert log_probs.shape == (BATCH, NUM_CLASSES)
    assert fattn.shape == (BATCH, SEQ_LEN)
    assert attn_tensor.shape == (BATCH, SEQ_LEN, SEQ_LEN)
    # log_softmax rows must sum to 1 in prob space
    assert jnp.allclose(jnp.sum(jnp.exp(log_probs), axis=-1), 1.0, atol=1e-5)
    # attention rows must sum to 1
    assert jnp.allclose(jnp.sum(attn_tensor, axis=-1), 1.0, atol=1e-4)
    assert jnp.allclose(jnp.sum(fattn, axis=-1), 1.0, atol=1e-5)

    print("KERNEL_OK")
</pallas_src>

<mosaic_0001>
module attributes {stable_mosaic.version = 11 : i64} {
  func.func @fused_forward_kernel(%arg0: memref<16x1xi32, #tpu.memory_space<vmem>>, %arg1: memref<4x32xf32, #tpu.memory_space<vmem>>, %arg2: memref<8x32xf32, #tpu.memory_space<vmem>>, %arg3: memref<2x32x192xf32, #tpu.memory_space<vmem>>, %arg4: memref<2x64x32xf32, #tpu.memory_space<vmem>>, %arg5: memref<2x1x32xf32, #tpu.memory_space<vmem>>, %arg6: memref<2x1x32xf32, #tpu.memory_space<vmem>>, %arg7: memref<2x1x32xf32, #tpu.memory_space<vmem>>, %arg8: memref<2x32x64xf32, #tpu.memory_space<vmem>>, %arg9: memref<2x1x64xf32, #tpu.memory_space<vmem>>, %arg10: memref<2x64x32xf32, #tpu.memory_space<vmem>>, %arg11: memref<2x1x32xf32, #tpu.memory_space<vmem>>, %arg12: memref<2x1x32xf32, #tpu.memory_space<vmem>>, %arg13: memref<2x1x32xf32, #tpu.memory_space<vmem>>, %arg14: memref<1x32xf32, #tpu.memory_space<vmem>>, %arg15: memref<32x2xf32, #tpu.memory_space<vmem>>, %arg16: memref<1x2xf32, #tpu.memory_space<vmem>>, %arg17: memref<2x2xf32, #tpu.memory_space<vmem>>, %arg18: memref<2x8xf32, #tpu.memory_space<vmem>>, %arg19: memref<2x8x8xf32, #tpu.memory_space<vmem>>) attributes {dimension_semantics = [], scalar_prefetch = 0 : i64, scratch_operands = 0 : i64, tpu.core_type = #tpu.core_type<tc>} {
    %c0 = arith.constant 0 : index
    %c0_0 = arith.constant 0 : index
    %0 = vector.load %arg0[%c0, %c0_0] : memref<16x1xi32, #tpu.memory_space<vmem>>, vector<16x1xi32>
    %1 = tpu.iota {dimensions = array<i32: 1>} : vector<16x4xi32>
    %2 = vector.broadcast %0 : vector<16x1xi32> to vector<16x4xi32>
    %3 = arith.cmpi eq, %2, %1 : vector<16x4xi32>
    %4 = arith.extui %3 : vector<16x4xi1> to vector<16x4xi32>
    %5 = arith.sitofp %4 : vector<16x4xi32> to vector<16x4xf32>
    %c0_1 = arith.constant 0 : index
    %c0_2 = arith.constant 0 : index
    %6 = vector.load %arg1[%c0_1, %c0_2] : memref<4x32xf32, #tpu.memory_space<vmem>>, vector<4x32xf32>
    %cst = arith.constant dense<0.000000e+00> : vector<16x32xf32>
    %7 = tpu.matmul %5, %6, %cst {dimension_numbers = #tpu.dot_dimension_numbers<[1], [0], [0], [1], [0, 0, 1, 1], [], []>} : vector<16x4xf32>, vector<4x32xf32>, vector<16x32xf32> -> vector<16x32xf32>
    %c0_3 = arith.constant 0 : index
    %c0_4 = arith.constant 0 : index
    %8 = vector.load %arg2[%c0_3, %c0_4] : memref<8x32xf32, #tpu.memory_space<vmem>>, vector<8x32xf32>
    %9 = tpu.concatenate %8, %8 in 0 : vector<8x32xf32>, vector<8x32xf32> -> vector<16x32xf32>
    %10 = arith.addf %7, %9 : vector<16x32xf32>
    %cst_5 = arith.constant 0.000000e+00 : f32
    %11 = vector.broadcast %cst_5 : f32 to vector<8x8xf32>
    %cst_6 = arith.constant 0.000000e+00 : f32
    %12 = vector.broadcast %cst_6 : f32 to vector<8x8xf32>
    %c0_7 = arith.constant 0 : index
    %c0_8 = arith.constant 0 : index
    %c0_9 = arith.constant 0 : index
    %13 = vector.load %arg3[%c0_7, %c0_8, %c0_9] : memref<2x32x192xf32, #tpu.memory_space<vmem>>, vector<1x32x192xf32>
    %14 = vector.shape_cast %13 : vector<1x32x192xf32> to vector<32x192xf32>
    %cst_10 = arith.constant dense<0.000000e+00> : vector<16x192xf32>
    %15 = tpu.matmul %10, %14, %cst_10 {dimension_numbers = #tpu.dot_dimension_numbers<[1], [0], [0], [1], [0, 0, 1, 1], [], []>} : vector<16x32xf32>, vector<32x192xf32>, vector<16x192xf32> -> vector<16x192xf32>
    %16 = vector.extract_strided_slice %15 {offsets = [0, 0], sizes = [8, 32], strides = [1, 1]} : vector<16x192xf32> to vector<8x32xf32>
    %17 = vector.extract_strided_slice %15 {offsets = [0, 64], sizes = [8, 32], strides = [1, 1]} : vector<16x192xf32> to vector<8x32xf32>
    %18 = vector.extract_strided_slice %15 {offsets = [0, 128], sizes = [8, 32], strides = [1, 1]} : vector<16x192xf32> to vector<8x32xf32>
    %cst_11 = arith.constant dense<0.000000e+00> : vector<8x8xf32>
    %19 = tpu.matmul %16, %17, %cst_11 {dimension_numbers = #tpu.dot_dimension_numbers<[1], [1], [0], [0], [0, 0, 1, 0], [], []>} : vector<8x32xf32>, vector<8x32xf32>, vector<8x8xf32> -> vector<8x8xf32>
    %cst_12 = arith.constant 0.176776692 : f32
    %20 = vector.broadcast %cst_12 : f32 to vector<8x8xf32>
    %21 = arith.mulf %19, %20 : vector<8x8xf32>
    %cst_13 = arith.constant dense<0xFF800000> : vector<8xf32>
    %22 = vector.multi_reduction <maximumf>, %21, %cst_13 [1] : vector<8x8xf32> to vector<8xf32>
    %23 = vector.shape_cast %22 : vector<8xf32> to vector<8x1xf32>
    %24 = vector.broadcast %23 : vector<8x1xf32> to vector<8x8xf32>
    %25 = arith.subf %21, %24 : vector<8x8xf32>
    %26 = math.exp %25 : vector<8x8xf32>
    %cst_14 = arith.constant dense<0.000000e+00> : vector<8xf32>
    %27 = vector.multi_reduction <add>, %26, %cst_14 [1] : vector<8x8xf32> to vector<8xf32>
    %28 = vector.shape_cast %27 : vector<8xf32> to vector<8x1xf32>
    %29 = vector.broadcast %28 : vector<8x1xf32> to vector<8x8xf32>
    %30 = arith.divf %26, %29 : vector<8x8xf32>
    %31 = arith.addf %11, %30 : vector<8x8xf32>
    %cst_15 = arith.constant dense<0.000000e+00> : vector<8x32xf32>
    %32 = tpu.matmul %30, %18, %cst_15 {dimension_numbers = #tpu.dot_dimension_numbers<[1], [0], [0], [1], [0, 0, 1, 1], [], []>} : vector<8x8xf32>, vector<8x32xf32>, vector<8x32xf32> -> vector<8x32xf32>
    %33 = vector.extract_strided_slice %15 {offsets = [0, 32], sizes = [8, 32], strides = [1, 1]} : vector<16x192xf32> to vector<8x32xf32>
    %34 = vector.extract_strided_slice %15 {offsets = [0, 96], sizes = [8, 32], strides = [1, 1]} : vector<16x192xf32> to vector<8x32xf32>
    %35 = vector.extract_strided_slice %15 {offsets = [0, 160], sizes = [8, 32], strides = [1, 1]} : vector<16x192xf32> to vector<8x32xf32>
    %cst_16 = arith.constant dense<0.000000e+00> : vector<8x8xf32>
    %36 = tpu.matmul %33, %34, %cst_16 {dimension_numbers = #tpu.dot_dimension_numbers<[1], [1], [0], [0], [0, 0, 1, 0], [], []>} : vector<8x32xf32>, vector<8x32xf32>, vector<8x8xf32> -> vector<8x8xf32>
    %cst_17 = arith.constant 0.176776692 : f32
    %37 = vector.broadcast %cst_17 : f32 to vector<8x8xf32>
    %38 = arith.mulf %36, %37 : vector<8x8xf32>
    %cst_18 = arith.constant dense<0xFF800000> : vector<8xf32>
    %39 = vector.multi_reduction <maximumf>, %38, %cst_18 [1] : vector<8x8xf32> to vector<8xf32>
    %40 = vector.shape_cast %39 : vector<8xf32> to vector<8x1xf32>
    %41 = vector.broadcast %40 : vector<8x1xf32> to vector<8x8xf32>
    %42 = arith.subf %38, %41 : vector<8x8xf32>
    %43 = math.exp %42 : vector<8x8xf32>
    %cst_19 = arith.constant dense<0.000000e+00> : vector<8xf32>
    %44 = vector.multi_reduction <add>, %43, %cst_19 [1] : vector<8x8xf32> to vector<8xf32>
    %45 = vector.shape_cast %44 : vector<8xf32> to vector<8x1xf32>
    %46 = vector.broadcast %45 : vector<8x1xf32> to vector<8x8xf32>
    %47 = arith.divf %43, %46 : vector<8x8xf32>
    %48 = arith.addf %31, %47 : vector<8x8xf32>
    %cst_20 = arith.constant dense<0.000000e+00> : vector<8x32xf32>
    %49 = tpu.matmul %47, %35, %cst_20 {dimension_numbers = #tpu.dot_dimension_numbers<[1], [0], [0], [1], [0, 0, 1, 1], [], []>} : vector<8x8xf32>, vector<8x32xf32>, vector<8x32xf32> -> vector<8x32xf32>
    %50 = tpu.concatenate %32, %49 in 1 : vector<8x32xf32>, vector<8x32xf32> -> vector<8x64xf32>
    %51 = vector.extract_strided_slice %15 {offsets = [8, 0], sizes = [8, 32], strides = [1, 1]} : vector<16x192xf32> to vector<8x32xf32>
    %52 = vector.extract_strided_slice %15 {offsets = [8, 64], sizes = [8, 32], strides = [1, 1]} : vector<16x192xf32> to vector<8x32xf32>
    %53 = vector.extract_strided_slice %15 {offsets = [8, 128], sizes = [8, 32], strides = [1, 1]} : vector<16x192xf32> to vector<8x32xf32>
    %cst_21 = arith.constant dense<0.000000e+00> : vector<8x8xf32>
    %54 = tpu.matmul %51, %52, %cst_21 {dimension_numbers = #tpu.dot_dimension_numbers<[1], [1], [0], [0], [0, 0, 1, 0], [], []>} : vector<8x32xf32>, vector<8x32xf32>, vector<8x8xf32> -> vector<8x8xf32>
    %cst_22 = arith.constant 0.176776692 : f32
    %55 = vector.broadcast %cst_22 : f32 to vector<8x8xf32>
    %56 = arith.mulf %54, %55 : vector<8x8xf32>
    %cst_23 = arith.constant dense<0xFF800000> : vector<8xf32>
    %57 = vector.multi_reduction <maximumf>, %56, %cst_23 [1] : vector<8x8xf32> to vector<8xf32>
    %58 = vector.shape_cast %57 : vector<8xf32> to vector<8x1xf32>
    %59 = vector.broadcast %58 : vector<8x1xf32> to vector<8x8xf32>
    %60 = arith.subf %56, %59 : vector<8x8xf32>
    %61 = math.exp %60 : vector<8x8xf32>
    %cst_24 = arith.constant dense<0.000000e+00> : vector<8xf32>
    %62 = vector.multi_reduction <add>, %61, %cst_24 [1] : vector<8x8xf32> to vector<8xf32>
    %63 = vector.shape_cast %62 : vector<8xf32> to vector<8x1xf32>
    %64 = vector.broadcast %63 : vector<8x1xf32> to vector<8x8xf32>
    %65 = arith.divf %61, %64 : vector<8x8xf32>
    %66 = arith.addf %12, %65 : vector<8x8xf32>
    %cst_25 = arith.constant dense<0.000000e+00> : vector<8x32xf32>
    %67 = tpu.matmul %65, %53, %cst_25 {dimension_numbers = #tpu.dot_dimension_numbers<[1], [0], [0], [1], [0, 0, 1, 1], [], []>} : vector<8x8xf32>, vector<8x32xf32>, vector<8x32xf32> -> vector<8x32xf32>
    %68 = vector.extract_strided_slice %15 {offsets = [8, 32], sizes = [8, 32], strides = [1, 1]} : vector<16x192xf32> to vector<8x32xf32>
    %69 = vector.extract_strided_slice %15 {offsets = [8, 96], sizes = [8, 32], strides = [1, 1]} : vector<16x192xf32> to vector<8x32xf32>
    %70 = vector.extract_strided_slice %15 {offsets = [8, 160], sizes = [8, 32], strides = [1, 1]} : vector<16x192xf32> to vector<8x32xf32>
    %cst_26 = arith.constant dense<0.000000e+00> : vector<8x8xf32>
    %71 = tpu.matmul %68, %69, %cst_26 {dimension_numbers = #tpu.dot_dimension_numbers<[1], [1], [0], [0], [0, 0, 1, 0], [], []>} : vector<8x32xf32>, vector<8x32xf32>, vector<8x8xf32> -> vector<8x8xf32>
    %cst_27 = arith.constant 0.176776692 : f32
    %72 = vector.broadcast %cst_27 : f32 to vector<8x8xf32>
    %73 = arith.mulf %71, %72 : vector<8x8xf32>
    %cst_28 = arith.constant dense<0xFF800000> : vector<8xf32>
    %74 = vector.multi_reduction <maximumf>, %73, %cst_28 [1] : vector<8x8xf32> to vector<8xf32>
    %75 = vector.shape_cast %74 : vector<8xf32> to vector<8x1xf32>
    %76 = vector.broadcast %75 : vector<8x1xf32> to vector<8x8xf32>
    %77 = arith.subf %73, %76 : vector<8x8xf32>
    %78 = math.exp %77 : vector<8x8xf32>
    %cst_29 = arith.constant dense<0.000000e+00> : vector<8xf32>
    %79 = vector.multi_reduction <add>, %78, %cst_29 [1] : vector<8x8xf32> to vector<8xf32>
    %80 = vector.shape_cast %79 : vector<8xf32> to vector<8x1xf32>
    %81 = vector.broadcast %80 : vector<8x1xf32> to vector<8x8xf32>
    %82 = arith.divf %78, %81 : vector<8x8xf32>
    %83 = arith.addf %66, %82 : vector<8x8xf32>
    %cst_30 = arith.constant dense<0.000000e+00> : vector<8x32xf32>
    %84 = tpu.matmul %82, %70, %cst_30 {dimension_numbers = #tpu.dot_dimension_numbers<[1], [0], [0], [1], [0, 0, 1, 1], [], []>} : vector<8x8xf32>, vector<8x32xf32>, vector<8x32xf32> -> vector<8x32xf32>
    %85 = tpu.concatenate %67, %84 in 1 : vector<8x32xf32>, vector<8x32xf32> -> vector<8x64xf32>
    %86 = tpu.concatenate %50, %85 in 0 : vector<8x64xf32>, vector<8x64xf32> -> vector<16x64xf32>
    %c0_31 = arith.constant 0 : index
    %c0_32 = arith.constant 0 : index
    %c0_33 = arith.constant 0 : index
    %87 = vector.load %arg4[%c0_31, %c0_32, %c0_33] : memref<2x64x32xf32, #tpu.memory_space<vmem>>, vector<1x64x32xf32>
    %88 = vector.shape_cast %87 : vector<1x64x32xf32> to vector<64x32xf32>
    %cst_34 = arith.constant dense<0.000000e+00> : vector<16x32xf32>
    %89 = tpu.matmul %86, %88, %cst_34 {dimension_numbers = #tpu.dot_dimension_numbers<[1], [0], [0], [1], [0, 0, 1, 1], [], []>} : vector<16x64xf32>, vector<64x32xf32>, vector<16x32xf32> -> vector<16x32xf32>
    %c0_35 = arith.constant 0 : index
    %c0_36 = arith.constant 0 : index
    %c0_37 = arith.constant 0 : index
    %90 = vector.load %arg5[%c0_35, %c0_36, %c0_37] : memref<2x1x32xf32, #tpu.memory_space<vmem>>, vector<1x1x32xf32>
    %91 = vector.shape_cast %90 : vector<1x1x32xf32> to vector<1x32xf32>
    %92 = vector.broadcast %91 : vector<1x32xf32> to vector<16x32xf32>
    %93 = arith.addf %89, %92 : vector<16x32xf32>
    %94 = arith.addf %93, %10 : vector<16x32xf32>
    %c0_38 = arith.constant 0 : index
    %c0_39 = arith.constant 0 : index
    %c0_40 = arith.constant 0 : index
    %95 = vector.load %arg6[%c0_38, %c0_39, %c0_40] : memref<2x1x32xf32, #tpu.memory_space<vmem>>, vector<1x1x32xf32>
    %96 = vector.shape_cast %95 : vector<1x1x32xf32> to vector<1x32xf32>
    %c0_41 = arith.constant 0 : index
    %c0_42 = arith.constant 0 : index
    %c0_43 = arith.constant 0 : index
    %97 = vector.load %arg7[%c0_41, %c0_42, %c0_43] : memref<2x1x32xf32, #tpu.memory_space<vmem>>, vector<1x1x32xf32>
    %98 = vector.shape_cast %97 : vector<1x1x32xf32> to vector<1x32xf32>
    %cst_44 = arith.constant dense<0.000000e+00> : vector<16xf32>
    %99 = vector.multi_reduction <add>, %94, %cst_44 [1] : vector<16x32xf32> to vector<16xf32>
    %100 = vector.shape_cast %99 : vector<16xf32> to vector<16x1xf32>
    %cst_45 = arith.constant 3.200000e+01 : f32
    %101 = vector.broadcast %cst_45 : f32 to vector<16x1xf32>
    %102 = arith.divf %100, %101 : vector<16x1xf32>
    %103 = vector.broadcast %102 : vector<16x1xf32> to vector<16x32xf32>
    %104 = arith.subf %94, %103 : vector<16x32xf32>
    %105 = arith.mulf %104, %104 : vector<16x32xf32>
    %cst_46 = arith.constant dense<0.000000e+00> : vector<16xf32>
    %106 = vector.multi_reduction <add>, %105, %cst_46 [1] : vector<16x32xf32> to vector<16xf32>
    %107 = vector.shape_cast %106 : vector<16xf32> to vector<16x1xf32>
    %cst_47 = arith.constant 3.200000e+01 : f32
    %108 = vector.broadcast %cst_47 : f32 to vector<16x1xf32>
    %109 = arith.divf %107, %108 : vector<16x1xf32>
    %110 = vector.broadcast %102 : vector<16x1xf32> to vector<16x32xf32>
    %111 = arith.subf %94, %110 : vector<16x32xf32>
    %cst_48 = arith.constant 9.99999974E-6 : f32
    %112 = vector.broadcast %cst_48 : f32 to vector<16x1xf32>
    %113 = arith.addf %109, %112 : vector<16x1xf32>
    %114 = math.sqrt %113 : vector<16x1xf32>
    %115 = vector.broadcast %114 : vector<16x1xf32> to vector<16x32xf32>
    %116 = arith.divf %111, %115 : vector<16x32xf32>
    %117 = vector.broadcast %96 : vector<1x32xf32> to vector<16x32xf32>
    %118 = arith.mulf %116, %117 : vector<16x32xf32>
    %119 = vector.broadcast %98 : vector<1x32xf32> to vector<16x32xf32>
    %120 = arith.addf %118, %119 : vector<16x32xf32>
    %c0_49 = arith.constant 0 : index
    %c0_50 = arith.constant 0 : index
    %c0_51 = arith.constant 0 : index
    %121 = vector.load %arg8[%c0_49, %c0_50, %c0_51] : memref<2x32x64xf32, #tpu.memory_space<vmem>>, vector<1x32x64xf32>
    %122 = vector.shape_cast %121 : vector<1x32x64xf32> to vector<32x64xf32>
    %cst_52 = arith.constant dense<0.000000e+00> : vector<16x64xf32>
    %123 = tpu.matmul %120, %122, %cst_52 {dimension_numbers = #tpu.dot_dimension_numbers<[1], [0], [0], [1], [0, 0, 1, 1], [], []>} : vector<16x32xf32>, vector<32x64xf32>, vector<16x64xf32> -> vector<16x64xf32>
    %c0_53 = arith.constant 0 : index
    %c0_54 = arith.constant 0 : index
    %c0_55 = arith.constant 0 : index
    %124 = vector.load %arg9[%c0_53, %c0_54, %c0_55] : memref<2x1x64xf32, #tpu.memory_space<vmem>>, vector<1x1x64xf32>
    %125 = vector.shape_cast %124 : vector<1x1x64xf32> to vector<1x64xf32>
    %126 = vector.broadcast %125 : vector<1x64xf32> to vector<16x64xf32>
    %127 = arith.addf %123, %126 : vector<16x64xf32>
    %cst_56 = arith.constant 0.000000e+00 : f32
    %128 = vector.broadcast %cst_56 : f32 to vector<16x64xf32>
    %129 = arith.maximumf %127, %128 : vector<16x64xf32>
    %c0_57 = arith.constant 0 : index
    %c0_58 = arith.constant 0 : index
    %c0_59 = arith.constant 0 : index
    %130 = vector.load %arg10[%c0_57, %c0_58, %c0_59] : memref<2x64x32xf32, #tpu.memory_space<vmem>>, vector<1x64x32xf32>
    %131 = vector.shape_cast %130 : vector<1x64x32xf32> to vector<64x32xf32>
    %cst_60 = arith.constant dense<0.000000e+00> : vector<16x32xf32>
    %132 = tpu.matmul %129, %131, %cst_60 {dimension_numbers = #tpu.dot_dimension_numbers<[1], [0], [0], [1], [0, 0, 1, 1], [], []>} : vector<16x64xf32>, vector<64x32xf32>, vector<16x32xf32> -> vector<16x32xf32>
    %c0_61 = arith.constant 0 : index
    %c0_62 = arith.constant 0 : index
    %c0_63 = arith.constant 0 : index
    %133 = vector.load %arg11[%c0_61, %c0_62, %c0_63] : memref<2x1x32xf32, #tpu.memory_space<vmem>>, vector<1x1x32xf32>
    %134 = vector.shape_cast %133 : vector<1x1x32xf32> to vector<1x32xf32>
    %135 = vector.broadcast %134 : vector<1x32xf32> to vector<16x32xf32>
    %136 = arith.addf %132, %135 : vector<16x32xf32>
    %137 = arith.addf %136, %120 : vector<16x32xf32>
    %c0_64 = arith.constant 0 : index
    %c0_65 = arith.constant 0 : index
    %c0_66 = arith.constant 0 : index
    %138 = vector.load %arg12[%c0_64, %c0_65, %c0_66] : memref<2x1x32xf32, #tpu.memory_space<vmem>>, vector<1x1x32xf32>
    %139 = vector.shape_cast %138 : vector<1x1x32xf32> to vector<1x32xf32>
    %c0_67 = arith.constant 0 : index
    %c0_68 = arith.constant 0 : index
    %c0_69 = arith.constant 0 : index
    %140 = vector.load %arg13[%c0_67, %c0_68, %c0_69] : memref<2x1x32xf32, #tpu.memory_space<vmem>>, vector<1x1x32xf32>
    %141 = vector.shape_cast %140 : vector<1x1x32xf32> to vector<1x32xf32>
    %cst_70 = arith.constant dense<0.000000e+00> : vector<16xf32>
    %142 = vector.multi_reduction <add>, %137, %cst_70 [1] : vector<16x32xf32> to vector<16xf32>
    %143 = vector.shape_cast %142 : vector<16xf32> to vector<16x1xf32>
    %cst_71 = arith.constant 3.200000e+01 : f32
    %144 = vector.broadcast %cst_71 : f32 to vector<16x1xf32>
    %145 = arith.divf %143, %144 : vector<16x1xf32>
    %146 = vector.broadcast %145 : vector<16x1xf32> to vector<16x32xf32>
    %147 = arith.subf %137, %146 : vector<16x32xf32>
    %148 = arith.mulf %147, %147 : vector<16x32xf32>
    %cst_72 = arith.constant dense<0.000000e+00> : vector<16xf32>
    %149 = vector.multi_reduction <add>, %148, %cst_72 [1] : vector<16x32xf32> to vector<16xf32>
    %150 = vector.shape_cast %149 : vector<16xf32> to vector<16x1xf32>
    %cst_73 = arith.constant 3.200000e+01 : f32
    %151 = vector.broadcast %cst_73 : f32 to vector<16x1xf32>
    %152 = arith.divf %150, %151 : vector<16x1xf32>
    %153 = vector.broadcast %145 : vector<16x1xf32> to vector<16x32xf32>
    %154 = arith.subf %137, %153 : vector<16x32xf32>
    %cst_74 = arith.constant 9.99999974E-6 : f32
    %155 = vector.broadcast %cst_74 : f32 to vector<16x1xf32>
    %156 = arith.addf %152, %155 : vector<16x1xf32>
    %157 = math.sqrt %156 : vector<16x1xf32>
    %158 = vector.broadcast %157 : vector<16x1xf32> to vector<16x32xf32>
    %159 = arith.divf %154, %158 : vector<16x32xf32>
    %160 = vector.broadcast %139 : vector<1x32xf32> to vector<16x32xf32>
    %161 = arith.mulf %159, %160 : vector<16x32xf32>
    %162 = vector.broadcast %141 : vector<1x32xf32> to vector<16x32xf32>
    %163 = arith.addf %161, %162 : vector<16x32xf32>
    %c1 = arith.constant 1 : index
    %c0_75 = arith.constant 0 : index
    %c0_76 = arith.constant 0 : index
    %164 = vector.load %arg3[%c1, %c0_75, %c0_76] : memref<2x32x192xf32, #tpu.memory_space<vmem>>, vector<1x32x192xf32>
    %165 = vector.shape_cast %164 : vector<1x32x192xf32> to vector<32x192xf32>
    %cst_77 = arith.constant dense<0.000000e+00> : vector<16x192xf32>
    %166 = tpu.matmul %163, %165, %cst_77 {dimension_numbers = #tpu.dot_dimension_numbers<[1], [0], [0], [1], [0, 0, 1, 1], [], []>} : vector<16x32xf32>, vector<32x192xf32>, vector<16x192xf32> -> vector<16x192xf32>
    %167 = vector.extract_strided_slice %166 {offsets = [0, 0], sizes = [8, 32], strides = [1, 1]} : vector<16x192xf32> to vector<8x32xf32>
    %168 = vector.extract_strided_slice %166 {offsets = [0, 64], sizes = [8, 32], strides = [1, 1]} : vector<16x192xf32> to vector<8x32xf32>
    %169 = vector.extract_strided_slice %166 {offsets = [0, 128], sizes = [8, 32], strides = [1, 1]} : vector<16x192xf32> to vector<8x32xf32>
    %cst_78 = arith.constant dense<0.000000e+00> : vector<8x8xf32>
    %170 = tpu.matmul %167, %168, %cst_78 {dimension_numbers = #tpu.dot_dimension_numbers<[1], [1], [0], [0], [0, 0, 1, 0], [], []>} : vector<8x32xf32>, vector<8x32xf32>, vector<8x8xf32> -> vector<8x8xf32>
    %cst_79 = arith.constant 0.176776692 : f32
    %171 = vector.broadcast %cst_79 : f32 to vector<8x8xf32>
    %172 = arith.mulf %170, %171 : vector<8x8xf32>
    %cst_80 = arith.constant dense<0xFF800000> : vector<8xf32>
    %173 = vector.multi_reduction <maximumf>, %172, %cst_80 [1] : vector<8x8xf32> to vector<8xf32>
    %174 = vector.shape_cast %173 : vector<8xf32> to vector<8x1xf32>
    %175 = vector.broadcast %174 : vector<8x1xf32> to vector<8x8xf32>
    %176 = arith.subf %172, %175 : vector<8x8xf32>
    %177 = math.exp %176 : vector<8x8xf32>
    %cst_81 = arith.constant dense<0.000000e+00> : vector<8xf32>
    %178 = vector.multi_reduction <add>, %177, %cst_81 [1] : vector<8x8xf32> to vector<8xf32>
    %179 = vector.shape_cast %178 : vector<8xf32> to vector<8x1xf32>
    %180 = vector.broadcast %179 : vector<8x1xf32> to vector<8x8xf32>
    %181 = arith.divf %177, %180 : vector<8x8xf32>
    %182 = arith.addf %48, %181 : vector<8x8xf32>
    %cst_82 = arith.constant dense<0.000000e+00> : vector<8x32xf32>
    %183 = tpu.matmul %181, %169, %cst_82 {dimension_numbers = #tpu.dot_dimension_numbers<[1], [0], [0], [1], [0, 0, 1, 1], [], []>} : vector<8x8xf32>, vector<8x32xf32>, vector<8x32xf32> -> vector<8x32xf32>
    %184 = vector.extract_strided_slice %166 {offsets = [0, 32], sizes = [8, 32], strides = [1, 1]} : vector<16x192xf32> to vector<8x32xf32>
    %185 = vector.extract_strided_slice %166 {offsets = [0, 96], sizes = [8, 32], strides = [1, 1]} : vector<16x192xf32> to vector<8x32xf32>
    %186 = vector.extract_strided_slice %166 {offsets = [0, 160], sizes = [8, 32], strides = [1, 1]} : vector<16x192xf32> to vector<8x32xf32>
    %cst_83 = arith.constant dense<0.000000e+00> : vector<8x8xf32>
    %187 = tpu.matmul %184, %185, %cst_83 {dimension_numbers = #tpu.dot_dimension_numbers<[1], [1], [0], [0], [0, 0, 1, 0], [], []>} : vector<8x32xf32>, vector<8x32xf32>, vector<8x8xf32> -> vector<8x8xf32>
    %cst_84 = arith.constant 0.176776692 : f32
    %188 = vector.broadcast %cst_84 : f32 to vector<8x8xf32>
    %189 = arith.mulf %187, %188 : vector<8x8xf32>
    %cst_85 = arith.constant dense<0xFF800000> : vector<8xf32>
    %190 = vector.multi_reduction <maximumf>, %189, %cst_85 [1] : vector<8x8xf32> to vector<8xf32>
    %191 = vector.shape_cast %190 : vector<8xf32> to vector<8x1xf32>
    %192 = vector.broadcast %191 : vector<8x1xf32> to vector<8x8xf32>
    %193 = arith.subf %189, %192 : vector<8x8xf32>
    %194 = math.exp %193 : vector<8x8xf32>
    %cst_86 = arith.constant dense<0.000000e+00> : vector<8xf32>
    %195 = vector.multi_reduction <add>, %194, %cst_86 [1] : vector<8x8xf32> to vector<8xf32>
    %196 = vector.shape_cast %195 : vector<8xf32> to vector<8x1xf32>
    %197 = vector.broadcast %196 : vector<8x1xf32> to vector<8x8xf32>
    %198 = arith.divf %194, %197 : vector<8x8xf32>
    %199 = arith.addf %182, %198 : vector<8x8xf32>
    %cst_87 = arith.constant dense<0.000000e+00> : vector<8x32xf32>
    %200 = tpu.matmul %198, %186, %cst_87 {dimension_numbers = #tpu.dot_dimension_numbers<[1], [0], [0], [1], [0, 0, 1, 1], [], []>} : vector<8x8xf32>, vector<8x32xf32>, vector<8x32xf32> -> vector<8x32xf32>
    %201 = tpu.concatenate %183, %200 in 1 : vector<8x32xf32>, vector<8x32xf32> -> vector<8x64xf32>
    %202 = vector.extract_strided_slice %166 {offsets = [8, 0], sizes = [8, 32], strides = [1, 1]} : vector<16x192xf32> to vector<8x32xf32>
    %203 = vector.extract_strided_slice %166 {offsets = [8, 64], sizes = [8, 32], strides = [1, 1]} : vector<16x192xf32> to vector<8x32xf32>
    %204 = vector.extract_strided_slice %166 {offsets = [8, 128], sizes = [8, 32], strides = [1, 1]} : vector<16x192xf32> to vector<8x32xf32>
    %cst_88 = arith.constant dense<0.000000e+00> : vector<8x8xf32>
    %205 = tpu.matmul %202, %203, %cst_88 {dimension_numbers = #tpu.dot_dimension_numbers<[1], [1], [0], [0], [0, 0, 1, 0], [], []>} : vector<8x32xf32>, vector<8x32xf32>, vector<8x8xf32> -> vector<8x8xf32>
    %cst_89 = arith.constant 0.176776692 : f32
    %206 = vector.broadcast %cst_89 : f32 to vector<8x8xf32>
    %207 = arith.mulf %205, %206 : vector<8x8xf32>
    %cst_90 = arith.constant dense<0xFF800000> : vector<8xf32>
    %208 = vector.multi_reduction <maximumf>, %207, %cst_90 [1] : vector<8x8xf32> to vector<8xf32>
    %209 = vector.shape_cast %208 : vector<8xf32> to vector<8x1xf32>
    %210 = vector.broadcast %209 : vector<8x1xf32> to vector<8x8xf32>
    %211 = arith.subf %207, %210 : vector<8x8xf32>
    %212 = math.exp %211 : vector<8x8xf32>
    %cst_91 = arith.constant dense<0.000000e+00> : vector<8xf32>
    %213 = vector.multi_reduction <add>, %212, %cst_91 [1] : vector<8x8xf32> to vector<8xf32>
    %214 = vector.shape_cast %213 : vector<8xf32> to vector<8x1xf32>
    %215 = vector.broadcast %214 : vector<8x1xf32> to vector<8x8xf32>
    %216 = arith.divf %212, %215 : vector<8x8xf32>
    %217 = arith.addf %83, %216 : vector<8x8xf32>
    %cst_92 = arith.constant dense<0.000000e+00> : vector<8x32xf32>
    %218 = tpu.matmul %216, %204, %cst_92 {dimension_numbers = #tpu.dot_dimension_numbers<[1], [0], [0], [1], [0, 0, 1, 1], [], []>} : vector<8x8xf32>, vector<8x32xf32>, vector<8x32xf32> -> vector<8x32xf32>
    %219 = vector.extract_strided_slice %166 {offsets = [8, 32], sizes = [8, 32], strides = [1, 1]} : vector<16x192xf32> to vector<8x32xf32>
    %220 = vector.extract_strided_slice %166 {offsets = [8, 96], sizes = [8, 32], strides = [1, 1]} : vector<16x192xf32> to vector<8x32xf32>
    %221 = vector.extract_strided_slice %166 {offsets = [8, 160], sizes = [8, 32], strides = [1, 1]} : vector<16x192xf32> to vector<8x32xf32>
    %cst_93 = arith.constant dense<0.000000e+00> : vector<8x8xf32>
    %222 = tpu.matmul %219, %220, %cst_93 {dimension_numbers = #tpu.dot_dimension_numbers<[1], [1], [0], [0], [0, 0, 1, 0], [], []>} : vector<8x32xf32>, vector<8x32xf32>, vector<8x8xf32> -> vector<8x8xf32>
    %cst_94 = arith.constant 0.176776692 : f32
    %223 = vector.broadcast %cst_94 : f32 to vector<8x8xf32>
    %224 = arith.mulf %222, %223 : vector<8x8xf32>
    %cst_95 = arith.constant dense<0xFF800000> : vector<8xf32>
    %225 = vector.multi_reduction <maximumf>, %224, %cst_95 [1] : vector<8x8xf32> to vector<8xf32>
    %226 = vector.shape_cast %225 : vector<8xf32> to vector<8x1xf32>
    %227 = vector.broadcast %226 : vector<8x1xf32> to vector<8x8xf32>
    %228 = arith.subf %224, %227 : vector<8x8xf32>
    %229 = math.exp %228 : vector<8x8xf32>
    %cst_96 = arith.constant dense<0.000000e+00> : vector<8xf32>
    %230 = vector.multi_reduction <add>, %229, %cst_96 [1] : vector<8x8xf32> to vector<8xf32>
    %231 = vector.shape_cast %230 : vector<8xf32> to vector<8x1xf32>
    %232 = vector.broadcast %231 : vector<8x1xf32> to vector<8x8xf32>
    %233 = arith.divf %229, %232 : vector<8x8xf32>
    %234 = arith.addf %217, %233 : vector<8x8xf32>
    %cst_97 = arith.constant dense<0.000000e+00> : vector<8x32xf32>
    %235 = tpu.matmul %233, %221, %cst_97 {dimension_numbers = #tpu.dot_dimension_numbers<[1], [0], [0], [1], [0, 0, 1, 1], [], []>} : vector<8x8xf32>, vector<8x32xf32>, vector<8x32xf32> -> vector<8x32xf32>
    %236 = tpu.concatenate %218, %235 in 1 : vector<8x32xf32>, vector<8x32xf32> -> vector<8x64xf32>
    %237 = tpu.concatenate %201, %236 in 0 : vector<8x64xf32>, vector<8x64xf32> -> vector<16x64xf32>
    %c1_98 = arith.constant 1 : index
    %c0_99 = arith.constant 0 : index
    %c0_100 = arith.constant 0 : index
    %238 = vector.load %arg4[%c1_98, %c0_99, %c0_100] : memref<2x64x32xf32, #tpu.memory_space<vmem>>, vector<1x64x32xf32>
    %239 = vector.shape_cast %238 : vector<1x64x32xf32> to vector<64x32xf32>
    %cst_101 = arith.constant dense<0.000000e+00> : vector<16x32xf32>
    %240 = tpu.matmul %237, %239, %cst_101 {dimension_numbers = #tpu.dot_dimension_numbers<[1], [0], [0], [1], [0, 0, 1, 1], [], []>} : vector<16x64xf32>, vector<64x32xf32>, vector<16x32xf32> -> vector<16x32xf32>
    %c1_102 = arith.constant 1 : index
    %c0_103 = arith.constant 0 : index
    %c0_104 = arith.constant 0 : index
    %241 = vector.load %arg5[%c1_102, %c0_103, %c0_104] : memref<2x1x32xf32, #tpu.memory_space<vmem>>, vector<1x1x32xf32>
    %242 = vector.shape_cast %241 : vector<1x1x32xf32> to vector<1x32xf32>
    %243 = vector.broadcast %242 : vector<1x32xf32> to vector<16x32xf32>
    %244 = arith.addf %240, %243 : vector<16x32xf32>
    %245 = arith.addf %244, %163 : vector<16x32xf32>
    %c1_105 = arith.constant 1 : index
    %c0_106 = arith.constant 0 : index
    %c0_107 = arith.constant 0 : index
    %246 = vector.load %arg6[%c1_105, %c0_106, %c0_107] : memref<2x1x32xf32, #tpu.memory_space<vmem>>, vector<1x1x32xf32>
    %247 = vector.shape_cast %246 : vector<1x1x32xf32> to vector<1x32xf32>
    %c1_108 = arith.constant 1 : index
    %c0_109 = arith.constant 0 : index
    %c0_110 = arith.constant 0 : index
    %248 = vector.load %arg7[%c1_108, %c0_109, %c0_110] : memref<2x1x32xf32, #tpu.memory_space<vmem>>, vector<1x1x32xf32>
    %249 = vector.shape_cast %248 : vector<1x1x32xf32> to vector<1x32xf32>
    %cst_111 = arith.constant dense<0.000000e+00> : vector<16xf32>
    %250 = vector.multi_reduction <add>, %245, %cst_111 [1] : vector<16x32xf32> to vector<16xf32>
    %251 = vector.shape_cast %250 : vector<16xf32> to vector<16x1xf32>
    %cst_112 = arith.constant 3.200000e+01 : f32
    %252 = vector.broadcast %cst_112 : f32 to vector<16x1xf32>
    %253 = arith.divf %251, %252 : vector<16x1xf32>
    %254 = vector.broadcast %253 : vector<16x1xf32> to vector<16x32xf32>
    %255 = arith.subf %245, %254 : vector<16x32xf32>
    %256 = arith.mulf %255, %255 : vector<16x32xf32>
    %cst_113 = arith.constant dense<0.000000e+00> : vector<16xf32>
    %257 = vector.multi_reduction <add>, %256, %cst_113 [1] : vector<16x32xf32> to vector<16xf32>
    %258 = vector.shape_cast %257 : vector<16xf32> to vector<16x1xf32>
    %cst_114 = arith.constant 3.200000e+01 : f32
    %259 = vector.broadcast %cst_114 : f32 to vector<16x1xf32>
    %260 = arith.divf %258, %259 : vector<16x1xf32>
    %261 = vector.broadcast %253 : vector<16x1xf32> to vector<16x32xf32>
    %262 = arith.subf %245, %261 : vector<16x32xf32>
    %cst_115 = arith.constant 9.99999974E-6 : f32
    %263 = vector.broadcast %cst_115 : f32 to vector<16x1xf32>
    %264 = arith.addf %260, %263 : vector<16x1xf32>
    %265 = math.sqrt %264 : vector<16x1xf32>
    %266 = vector.broadcast %265 : vector<16x1xf32> to vector<16x32xf32>
    %267 = arith.divf %262, %266 : vector<16x32xf32>
    %268 = vector.broadcast %247 : vector<1x32xf32> to vector<16x32xf32>
    %269 = arith.mulf %267, %268 : vector<16x32xf32>
    %270 = vector.broadcast %249 : vector<1x32xf32> to vector<16x32xf32>
    %271 = arith.addf %269, %270 : vector<16x32xf32>
    %c1_116 = arith.constant 1 : index
    %c0_117 = arith.constant 0 : index
    %c0_118 = arith.constant 0 : index
    %272 = vector.load %arg8[%c1_116, %c0_117, %c0_118] : memref<2x32x64xf32, #tpu.memory_space<vmem>>, vector<1x32x64xf32>
    %273 = vector.shape_cast %272 : vector<1x32x64xf32> to vector<32x64xf32>
    %cst_119 = arith.constant dense<0.000000e+00> : vector<16x64xf32>
    %274 = tpu.matmul %271, %273, %cst_119 {dimension_numbers = #tpu.dot_dimension_numbers<[1], [0], [0], [1], [0, 0, 1, 1], [], []>} : vector<16x32xf32>, vector<32x64xf32>, vector<16x64xf32> -> vector<16x64xf32>
    %c1_120 = arith.constant 1 : index
    %c0_121 = arith.constant 0 : index
    %c0_122 = arith.constant 0 : index
    %275 = vector.load %arg9[%c1_120, %c0_121, %c0_122] : memref<2x1x64xf32, #tpu.memory_space<vmem>>, vector<1x1x64xf32>
    %276 = vector.shape_cast %275 : vector<1x1x64xf32> to vector<1x64xf32>
    %277 = vector.broadcast %276 : vector<1x64xf32> to vector<16x64xf32>
    %278 = arith.addf %274, %277 : vector<16x64xf32>
    %cst_123 = arith.constant 0.000000e+00 : f32
    %279 = vector.broadcast %cst_123 : f32 to vector<16x64xf32>
    %280 = arith.maximumf %278, %279 : vector<16x64xf32>
    %c1_124 = arith.constant 1 : index
    %c0_125 = arith.constant 0 : index
    %c0_126 = arith.constant 0 : index
    %281 = vector.load %arg10[%c1_124, %c0_125, %c0_126] : memref<2x64x32xf32, #tpu.memory_space<vmem>>, vector<1x64x32xf32>
    %282 = vector.shape_cast %281 : vector<1x64x32xf32> to vector<64x32xf32>
    %cst_127 = arith.constant dense<0.000000e+00> : vector<16x32xf32>
    %283 = tpu.matmul %280, %282, %cst_127 {dimension_numbers = #tpu.dot_dimension_numbers<[1], [0], [0], [1], [0, 0, 1, 1], [], []>} : vector<16x64xf32>, vector<64x32xf32>, vector<16x32xf32> -> vector<16x32xf32>
    %c1_128 = arith.constant 1 : index
    %c0_129 = arith.constant 0 : index
    %c0_130 = arith.constant 0 : index
    %284 = vector.load %arg11[%c1_128, %c0_129, %c0_130] : memref<2x1x32xf32, #tpu.memory_space<vmem>>, vector<1x1x32xf32>
    %285 = vector.shape_cast %284 : vector<1x1x32xf32> to vector<1x32xf32>
    %286 = vector.broadcast %285 : vector<1x32xf32> to vector<16x32xf32>
    %287 = arith.addf %283, %286 : vector<16x32xf32>
    %288 = arith.addf %287, %271 : vector<16x32xf32>
    %c1_131 = arith.constant 1 : index
    %c0_132 = arith.constant 0 : index
    %c0_133 = arith.constant 0 : index
    %289 = vector.load %arg12[%c1_131, %c0_132, %c0_133] : memref<2x1x32xf32, #tpu.memory_space<vmem>>, vector<1x1x32xf32>
    %290 = vector.shape_cast %289 : vector<1x1x32xf32> to vector<1x32xf32>
    %c1_134 = arith.constant 1 : index
    %c0_135 = arith.constant 0 : index
    %c0_136 = arith.constant 0 : index
    %291 = vector.load %arg13[%c1_134, %c0_135, %c0_136] : memref<2x1x32xf32, #tpu.memory_space<vmem>>, vector<1x1x32xf32>
    %292 = vector.shape_cast %291 : vector<1x1x32xf32> to vector<1x32xf32>
    %cst_137 = arith.constant dense<0.000000e+00> : vector<16xf32>
    %293 = vector.multi_reduction <add>, %288, %cst_137 [1] : vector<16x32xf32> to vector<16xf32>
    %294 = vector.shape_cast %293 : vector<16xf32> to vector<16x1xf32>
    %cst_138 = arith.constant 3.200000e+01 : f32
    %295 = vector.broadcast %cst_138 : f32 to vector<16x1xf32>
    %296 = arith.divf %294, %295 : vector<16x1xf32>
    %297 = vector.broadcast %296 : vector<16x1xf32> to vector<16x32xf32>
    %298 = arith.subf %288, %297 : vector<16x32xf32>
    %299 = arith.mulf %298, %298 : vector<16x32xf32>
    %cst_139 = arith.constant dense<0.000000e+00> : vector<16xf32>
    %300 = vector.multi_reduction <add>, %299, %cst_139 [1] : vector<16x32xf32> to vector<16xf32>
    %301 = vector.shape_cast %300 : vector<16xf32> to vector<16x1xf32>
    %cst_140 = arith.constant 3.200000e+01 : f32
    %302 = vector.broadcast %cst_140 : f32 to vector<16x1xf32>
    %303 = arith.divf %301, %302 : vector<16x1xf32>
    %304 = vector.broadcast %296 : vector<16x1xf32> to vector<16x32xf32>
    %305 = arith.subf %288, %304 : vector<16x32xf32>
    %cst_141 = arith.constant 9.99999974E-6 : f32
    %306 = vector.broadcast %cst_141 : f32 to vector<16x1xf32>
    %307 = arith.addf %303, %306 : vector<16x1xf32>
    %308 = math.sqrt %307 : vector<16x1xf32>
    %309 = vector.broadcast %308 : vector<16x1xf32> to vector<16x32xf32>
    %310 = arith.divf %305, %309 : vector<16x32xf32>
    %311 = vector.broadcast %290 : vector<1x32xf32> to vector<16x32xf32>
    %312 = arith.mulf %310, %311 : vector<16x32xf32>
    %313 = vector.broadcast %292 : vector<1x32xf32> to vector<16x32xf32>
    %314 = arith.addf %312, %313 : vector<16x32xf32>
    %cst_142 = arith.constant 2.500000e-01 : f32
    %315 = vector.broadcast %cst_142 : f32 to vector<8x8xf32>
    %316 = arith.mulf %199, %315 : vector<8x8xf32>
    %c0_143 = arith.constant 0 : index
    %c0_144 = arith.constant 0 : index
    %c0_145 = arith.constant 0 : index
    %317 = vector.load %arg19[%c0_143, %c0_144, %c0_145] : memref<2x8x8xf32, #tpu.memory_space<vmem>>, vector<1x8x8xf32>
    %318 = vector.shape_cast %317 : vector<1x8x8xf32> to vector<8x8xf32>
    %319 = vector.shape_cast %316 : vector<8x8xf32> to vector<1x8x8xf32>
    tpu.vector_store %arg19[%c0_143, %c0_144, %c0_145], %319 {strides = array<i32>} : memref<2x8x8xf32, #tpu.memory_space<vmem>>, vector<1x8x8xf32>,
    %cst_146 = arith.constant 2.500000e-01 : f32
    %320 = vector.broadcast %cst_146 : f32 to vector<8x8xf32>
    %321 = arith.mulf %234, %320 : vector<8x8xf32>
    %c1_147 = arith.constant 1 : index
    %c0_148 = arith.constant 0 : index
    %c0_149 = arith.constant 0 : index
    %322 = vector.load %arg19[%c1_147, %c0_148, %c0_149] : memref<2x8x8xf32, #tpu.memory_space<vmem>>, vector<1x8x8xf32>
    %323 = vector.shape_cast %322 : vector<1x8x8xf32> to vector<8x8xf32>
    %324 = vector.shape_cast %321 : vector<8x8xf32> to vector<1x8x8xf32>
    tpu.vector_store %arg19[%c1_147, %c0_148, %c0_149], %324 {strides = array<i32>} : memref<2x8x8xf32, #tpu.memory_space<vmem>>, vector<1x8x8xf32>,
    %c0_150 = arith.constant 0 : index
    %c0_151 = arith.constant 0 : index
    %325 = vector.load %arg14[%c0_150, %c0_151] : memref<1x32xf32, #tpu.memory_space<vmem>>, vector<1x32xf32>
    %326 = vector.extract_strided_slice %314 {offsets = [0, 0], sizes = [8, 32], strides = [1, 1]} : vector<16x32xf32> to vector<8x32xf32>
    %cst_152 = arith.constant dense<0.000000e+00> : vector<1x8xf32>
    %327 = tpu.matmul %325, %326, %cst_152 {dimension_numbers = #tpu.dot_dimension_numbers<[1], [1], [0], [0], [0, 0, 1, 0], [], []>} : vector<1x32xf32>, vector<8x32xf32>, vector<1x8xf32> -> vector<1x8xf32>
    %cst_153 = arith.constant 0.176776692 : f32
    %328 = vector.broadcast %cst_153 : f32 to vector<1x8xf32>
    %329 = arith.mulf %327, %328 : vector<1x8xf32>
    %cst_154 = arith.constant dense<0xFF800000> : vector<1xf32>
    %330 = vector.multi_reduction <maximumf>, %329, %cst_154 [1] : vector<1x8xf32> to vector<1xf32>
    %331 = vector.shape_cast %330 : vector<1xf32> to vector<1x1xf32>
    %332 = vector.broadcast %331 : vector<1x1xf32> to vector<1x8xf32>
    %333 = arith.subf %329, %332 : vector<1x8xf32>
    %334 = math.exp %333 : vector<1x8xf32>
    %cst_155 = arith.constant dense<0.000000e+00> : vector<1xf32>
    %335 = vector.multi_reduction <add>, %334, %cst_155 [1] : vector<1x8xf32> to vector<1xf32>
    %336 = vector.shape_cast %335 : vector<1xf32> to vector<1x1xf32>
    %337 = vector.broadcast %336 : vector<1x1xf32> to vector<1x8xf32>
    %338 = arith.divf %334, %337 : vector<1x8xf32>
    %cst_156 = arith.constant dense<0.000000e+00> : vector<1x32xf32>
    %339 = tpu.matmul %338, %326, %cst_156 {dimension_numbers = #tpu.dot_dimension_numbers<[1], [0], [0], [1], [0, 0, 1, 1], [], []>} : vector<1x8xf32>, vector<8x32xf32>, vector<1x32xf32> -> vector<1x32xf32>
    %340 = vector.extract_strided_slice %314 {offsets = [8, 0], sizes = [8, 32], strides = [1, 1]} : vector<16x32xf32> to vector<8x32xf32>
    %cst_157 = arith.constant dense<0.000000e+00> : vector<1x8xf32>
    %341 = tpu.matmul %325, %340, %cst_157 {dimension_numbers = #tpu.dot_dimension_numbers<[1], [1], [0], [0], [0, 0, 1, 0], [], []>} : vector<1x32xf32>, vector<8x32xf32>, vector<1x8xf32> -> vector<1x8xf32>
    %cst_158 = arith.constant 0.176776692 : f32
    %342 = vector.broadcast %cst_158 : f32 to vector<1x8xf32>
    %343 = arith.mulf %341, %342 : vector<1x8xf32>
    %cst_159 = arith.constant dense<0xFF800000> : vector<1xf32>
    %344 = vector.multi_reduction <maximumf>, %343, %cst_159 [1] : vector<1x8xf32> to vector<1xf32>
    %345 = vector.shape_cast %344 : vector<1xf32> to vector<1x1xf32>
    %346 = vector.broadcast %345 : vector<1x1xf32> to vector<1x8xf32>
    %347 = arith.subf %343, %346 : vector<1x8xf32>
    %348 = math.exp %347 : vector<1x8xf32>
    %cst_160 = arith.constant dense<0.000000e+00> : vector<1xf32>
    %349 = vector.multi_reduction <add>, %348, %cst_160 [1] : vector<1x8xf32> to vector<1xf32>
    %350 = vector.shape_cast %349 : vector<1xf32> to vector<1x1xf32>
    %351 = vector.broadcast %350 : vector<1x1xf32> to vector<1x8xf32>
    %352 = arith.divf %348, %351 : vector<1x8xf32>
    %cst_161 = arith.constant dense<0.000000e+00> : vector<1x32xf32>
    %353 = tpu.matmul %352, %340, %cst_161 {dimension_numbers = #tpu.dot_dimension_numbers<[1], [0], [0], [1], [0, 0, 1, 1], [], []>} : vector<1x8xf32>, vector<8x32xf32>, vector<1x32xf32> -> vector<1x32xf32>
    %354 = tpu.concatenate %338, %352 in 0 : vector<1x8xf32>, vector<1x8xf32> -> vector<2x8xf32>
    %c0_162 = arith.constant 0 : index
    %c0_163 = arith.constant 0 : index
    %355 = vector.load %arg18[%c0_162, %c0_163] : memref<2x8xf32, #tpu.memory_space<vmem>>, vector<2x8xf32>
    tpu.vector_store %arg18[%c0_162, %c0_163], %354 {strides = array<i32>} : memref<2x8xf32, #tpu.memory_space<vmem>>, vector<2x8xf32>,
    %356 = tpu.concatenate %339, %353 in 0 : vector<1x32xf32>, vector<1x32xf32> -> vector<2x32xf32>
    %c0_164 = arith.constant 0 : index
    %c0_165 = arith.constant 0 : index
    %357 = vector.load %arg15[%c0_164, %c0_165] : memref<32x2xf32, #tpu.memory_space<vmem>>, vector<32x2xf32>
    %cst_166 = arith.constant dense<0.000000e+00> : vector<2x2xf32>
    %358 = tpu.matmul %356, %357, %cst_166 {dimension_numbers = #tpu.dot_dimension_numbers<[1], [0], [0], [1], [0, 0, 1, 1], [], []>} : vector<2x32xf32>, vector<32x2xf32>, vector<2x2xf32> -> vector<2x2xf32>
    %c0_167 = arith.constant 0 : index
    %c0_168 = arith.constant 0 : index
    %359 = vector.load %arg16[%c0_167, %c0_168] : memref<1x2xf32, #tpu.memory_space<vmem>>, vector<1x2xf32>
    %360 = vector.broadcast %359 : vector<1x2xf32> to vector<2x2xf32>
    %361 = arith.addf %358, %360 : vector<2x2xf32>
    %cst_169 = arith.constant dense<0xFF800000> : vector<2xf32>
    %362 = vector.multi_reduction <maximumf>, %361, %cst_169 [1] : vector<2x2xf32> to vector<2xf32>
    %363 = vector.shape_cast %362 : vector<2xf32> to vector<2x1xf32>
    %364 = vector.broadcast %363 : vector<2x1xf32> to vector<2x2xf32>
    %365 = arith.subf %361, %364 : vector<2x2xf32>
    %366 = math.exp %365 : vector<2x2xf32>
    %cst_170 = arith.constant dense<0.000000e+00> : vector<2xf32>
    %367 = vector.multi_reduction <add>, %366, %cst_170 [1] : vector<2x2xf32> to vector<2xf32>
    %368 = vector.shape_cast %367 : vector<2xf32> to vector<2x1xf32>
    %369 = math.log %368 : vector<2x1xf32>
    %370 = arith.addf %363, %369 : vector<2x1xf32>
    %371 = vector.broadcast %370 : vector<2x1xf32> to vector<2x2xf32>
    %372 = arith.subf %361, %371 : vector<2x2xf32>
    %c0_171 = arith.constant 0 : index
    %c0_172 = arith.constant 0 : index
    %373 = vector.load %arg17[%c0_171, %c0_172] : memref<2x2xf32, #tpu.memory_space<vmem>>, vector<2x2xf32>
    tpu.vector_store %arg17[%c0_171, %c0_172], %372 {strides = array<i32>} : memref<2x2xf32, #tpu.memory_space<vmem>>, vector<2x2xf32>,
    return
  }
}

</mosaic_0001>

<llo_original>
// kernel: categ_criscas_forward.1
$region0: #{categ_criscas_forward.1}
  #allocation0 [shape = 'u32[]', space=smem, size = 0x4, offset = 0x4, fixed_abs, tag = 'smem constant byte address 0x4 - core index']
  #allocation1 [shape = 'u32[72,128]{1,0:T(1,128)}', space=vmem, size = 0x9000, scoped, tag = 'internal scratch']
  %s0 = inlined_call_operand.vmem [shape: s32[16,1], index: 0, kind: input, shape index: {}]
  %s1 = inlined_call_operand.vmem [shape: f32[4,32], index: 1, kind: input, shape index: {}]
  %s2 = inlined_call_operand.vmem [shape: f32[8,32], index: 2, kind: input, shape index: {}]
  %s3 = inlined_call_operand.vmem [shape: f32[2,32,192], index: 3, kind: input, shape index: {}]
  %s4 = inlined_call_operand.vmem [shape: f32[2,64,32], index: 4, kind: input, shape index: {}]
  %s5 = inlined_call_operand.vmem [shape: f32[2,1,32], index: 5, kind: input, shape index: {}]
  %s6 = inlined_call_operand.vmem [shape: f32[2,1,32], index: 6, kind: input, shape index: {}]
  %s7 = inlined_call_operand.vmem [shape: f32[2,1,32], index: 7, kind: input, shape index: {}]
  %s8 = inlined_call_operand.vmem [shape: f32[2,32,64], index: 8, kind: input, shape index: {}]
  %s9 = inlined_call_operand.vmem [shape: f32[2,1,64], index: 9, kind: input, shape index: {}]
  %s10 = inlined_call_operand.vmem [shape: f32[2,64,32], index: 10, kind: input, shape index: {}]
  %s11 = inlined_call_operand.vmem [shape: f32[2,1,32], index: 11, kind: input, shape index: {}]
  %s12 = inlined_call_operand.vmem [shape: f32[2,1,32], index: 12, kind: input, shape index: {}]
  %s13 = inlined_call_operand.vmem [shape: f32[2,1,32], index: 13, kind: input, shape index: {}]
  %s14 = inlined_call_operand.vmem [shape: f32[1,32], index: 14, kind: input, shape index: {}]
  %s15 = inlined_call_operand.vmem [shape: f32[32,2], index: 15, kind: input, shape index: {}]
  %s16 = inlined_call_operand.vmem [shape: f32[1,2], index: 16, kind: input, shape index: {}]
  %s17 = inlined_call_operand.hbm [shape: f32[2,2], index: 17, kind: output, shape index: {0}]
  %s18 = inlined_call_operand.hbm [shape: f32[2,8], index: 18, kind: output, shape index: {1}]
  %s19 = inlined_call_operand.hbm [shape: f32[2,8,8], index: 19, kind: output, shape index: {2}]
  %20 = xla_tuple %s17, %s18, %s19
  %s21 = sld [smem:[#allocation0]]
  $region94: #{categ_criscas_forward.1} parent=0
    _
  %s23 = ssub.s32 1, %s21
  %s24 = scalar_select 0, %s23, %s21
  $region1: #{categ_criscas_forward.1} parent=0
    #allocation2 [shape = 'u8[1024]{0}', space=vmem, size = 0x400, scoped, tag = 'output window, operand 0, single buffered']
    #allocation3 [shape = 's32[1]{0}', space=sflag, size = 0x4, scoped, tag = 'scoped memory for categ_criscas_forward.1']
    #allocation4 [shape = 'u8[1024]{0}', space=vmem, size = 0x400, scoped, tag = 'output window, operand 1, single buffered']
    #allocation5 [shape = 's32[1]{0}', space=sflag, size = 0x4, scoped, tag = 'scoped memory for categ_criscas_forward.1']
    #allocation6 [shape = 'u8[8192]{0}', space=vmem, size = 0x2000, scoped, tag = 'output window, operand 2, single buffered']
    %25 = vsyncpa [#allocation3], 0
    %26 = vsyncpa [#allocation5], 0
    // Predicated region
    $region2: #{categ_criscas_forward.1} parent=1 // pred_check
      _
    $region3: #{categ_criscas_forward.1} parent=1 // pred_check_branch
      %28 = sbr.rel (0) target = $region5
    $region4: #{categ_criscas_forward.1} parent=1 // pred_region
      _
    $region5: #{categ_criscas_forward.1} parent=1 // pred_fallthru
      _
    // Predicated region
    $region6: #{categ_criscas_forward.1} parent=1 // pred_check
      _
    $region7: #{categ_criscas_forward.1} parent=1 // pred_check_branch
      %30 = sbr.rel (0) target = $region9
    $region8: #{categ_criscas_forward.1} parent=1 // pred_region
      _
    $region9: #{categ_criscas_forward.1} parent=1 // pred_fallthru
      _
    // Predicated region
    $region10: #{categ_criscas_forward.1} parent=1 // pred_check
      _
    $region11: #{categ_criscas_forward.1} parent=1 // pred_check_branch
      %32 = sbr.rel (0) target = $region13
    $region12: #{categ_criscas_forward.1} parent=1 // pred_region
      _
    $region13: #{categ_criscas_forward.1} parent=1 // pred_fallthru
      _
    // Predicated region
    $region14: #{categ_criscas_forward.1} parent=1 // pred_check
      _
    $region15: #{categ_criscas_forward.1} parent=1 // pred_check_branch
      %34 = sbr.rel (0) target = $region17
    $region16: #{categ_criscas_forward.1} parent=1 // pred_region
      _
    $region17: #{categ_criscas_forward.1} parent=1 // pred_fallthru
      _
    // Predicated region
    $region18: #{categ_criscas_forward.1} parent=1 // pred_check
      _
    $region19: #{categ_criscas_forward.1} parent=1 // pred_check_branch
      %36 = sbr.rel (0) target = $region21
    $region20: #{categ_criscas_forward.1} parent=1 // pred_region
      _
    $region21: #{categ_criscas_forward.1} parent=1 // pred_fallthru
      _
    // Predicated region
    $region22: #{categ_criscas_forward.1} parent=1 // pred_check
      _
    $region23: #{categ_criscas_forward.1} parent=1 // pred_check_branch
      %38 = sbr.rel (0) target = $region25
    $region24: #{categ_criscas_forward.1} parent=1 // pred_region
      _
    $region25: #{categ_criscas_forward.1} parent=1 // pred_fallthru
      _
    // Predicated region
    $region26: #{categ_criscas_forward.1} parent=1 // pred_check
      _
    $region27: #{categ_criscas_forward.1} parent=1 // pred_check_branch
      %40 = sbr.rel (0) target = $region29
    $region28: #{categ_criscas_forward.1} parent=1 // pred_region
      _
    $region29: #{categ_criscas_forward.1} parent=1 // pred_fallthru
      _
    // Predicated region
    $region30: #{categ_criscas_forward.1} parent=1 // pred_check
      _
    $region31: #{categ_criscas_forward.1} parent=1 // pred_check_branch
      %42 = sbr.rel (0) target = $region33
    $region32: #{categ_criscas_forward.1} parent=1 // pred_region
      _
    $region33: #{categ_criscas_forward.1} parent=1 // pred_fallthru
      _
    // Predicated region
    $region34: #{categ_criscas_forward.1} parent=1 // pred_check
      _
    $region35: #{categ_criscas_forward.1} parent=1 // pred_check_branch
      %44 = sbr.rel (0) target = $region37
    $region36: #{categ_criscas_forward.1} parent=1 // pred_region
      _
    $region37: #{categ_criscas_forward.1} parent=1 // pred_fallthru
      _
    // Predicated region
    $region38: #{categ_criscas_forward.1} parent=1 // pred_check
      _
    $region39: #{categ_criscas_forward.1} parent=1 // pred_check_branch
      %46 = sbr.rel (0) target = $region41
    $region40: #{categ_criscas_forward.1} parent=1 // pred_region
      _
    $region41: #{categ_criscas_forward.1} parent=1 // pred_fallthru
      _
    // Predicated region
    $region42: #{categ_criscas_forward.1} parent=1 // pred_check
      _
    $region43: #{categ_criscas_forward.1} parent=1 // pred_check_branch
      %48 = sbr.rel (0) target = $region45
    $region44: #{categ_criscas_forward.1} parent=1 // pred_region
      _
    $region45: #{categ_criscas_forward.1} parent=1 // pred_fallthru
      _
    // Predicated region
    $region46: #{categ_criscas_forward.1} parent=1 // pred_check
      _
    $region47: #{categ_criscas_forward.1} parent=1 // pred_check_branch
      %50 = sbr.rel (0) target = $region49
    $region48: #{categ_criscas_forward.1} parent=1 // pred_region
      _
    $region49: #{categ_criscas_forward.1} parent=1 // pred_fallthru
      _
    // Predicated region
    $region50: #{categ_criscas_forward.1} parent=1 // pred_check
      _
    $region51: #{categ_criscas_forward.1} parent=1 // pred_check_branch
      %52 = sbr.rel (0) target = $region53
    $region52: #{categ_criscas_forward.1} parent=1 // pred_region
      _
    $region53: #{categ_criscas_forward.1} parent=1 // pred_fallthru
      _
    // Predicated region
    $region54: #{categ_criscas_forward.1} parent=1 // pred_check
      _
    $region55: #{categ_criscas_forward.1} parent=1 // pred_check_branch
      %54 = sbr.rel (0) target = $region57
    $region56: #{categ_criscas_forward.1} parent=1 // pred_region
      _
    $region57: #{categ_criscas_forward.1} parent=1 // pred_fallthru
      _
    // Predicated region
    $region58: #{categ_criscas_forward.1} parent=1 // pred_check
      _
    $region59: #{categ_criscas_forward.1} parent=1 // pred_check_branch
      %56 = sbr.rel (0) target = $region61
    $region60: #{categ_criscas_forward.1} parent=1 // pred_region
      _
    $region61: #{categ_criscas_forward.1} parent=1 // pred_fallthru
      _
    // Predicated region
    $region62: #{categ_criscas_forward.1} parent=1 // pred_check
      _
    $region63: #{categ_criscas_forward.1} parent=1 // pred_check_branch
      %58 = sbr.rel (0) target = $region65
    $region64: #{categ_criscas_forward.1} parent=1 // pred_region
      _
    $region65: #{categ_criscas_forward.1} parent=1 // pred_fallthru
      _
    // Predicated region
    $region66: #{categ_criscas_forward.1} parent=1 // pred_check
      _
    $region67: #{categ_criscas_forward.1} parent=1 // pred_check_branch
      %60 = sbr.rel (0) target = $region69
    $region68: #{categ_criscas_forward.1} parent=1 // pred_region
      _
    $region69: #{categ_criscas_forward.1} parent=1 // pred_fallthru
      _
    %v61 = vld [vmem:[%s0] sm:$0xff]
    %v62 = vld [vmem:[%s0 + $0x8] sm:$0xff]
    %v63 = vlaneseq
    %v64 = vand.u32 %v63, 127
    %65 = vset.pattern.permute.xlu0 0
    %66 = vperm.xlu0 %65, %v61
    %v67 = vpop.permute.xlu0 %66
    %68 = vset.pattern.permute.xlu0 0
    %69 = vperm.xlu0 %68, %v62
    %v70 = vpop.permute.xlu0 %69
    %vm71 = vcmp.eq.s32.totalorder %v67, %v64
    %vm72 = vcmp.eq.s32.totalorder %v70, %v64
    %v73 = vsel %vm71, 1, 0
    %v74 = vsel %vm72, 1, 0
    %v75 = vcvt.s32.f32 %v73
    %v76 = vcvt.s32.f32 %v74
    %v77 = vld [vmem:[%s1] sm:$0xf]
    %v78 = vld [vmem:[%s2] sm:$0xff]
    %vm79 = vcmask 31744
    %v81 = vsel %vm79, %v75, 0
    %v84 = vsel %vm79, %v76, 0
    %vm86 = vcmask 1043456
    %v88 = vsel %vm86, %v77, 0
    %90 = vmatpush.msra.mxu0 0.0
    %91 = vmatpush.msra.mxu0 0.0
    %92 = vmatpush.msra.mxu0 0.0
    %93 = vmatpush.msra.mxu0 0.0
    %94 = vmatpush.msra.mxu0 0.0
    %95 = vmatpush.msra.mxu0 0.0
    %96 = vmatpush.msra.mxu0 0.0
    %97 = vmatpush.msra.mxu0 0.0
    %98 = vmatpush.msra.mxu0 0.0
    %99 = vmatpush.msra.mxu0 0.0
    %100 = vmatpush.msra.mxu0 0.0
    %101 = vmatpush.msra.mxu0 0.0
    %102 = vmatpush.msra.mxu0 0.0
    %103 = vmatpush.msra.mxu0 0.0
    %104 = vmatpush.msra.mxu0 0.0
    %105 = vmatpush.msra.mxu0 %v88
    %106 = vmatmul.f32.gmra.mxu0 %v81
    %v107 = vpop.f32.mrf.mxu0
    %v108 = vadd.f32 %v78, %v107
    %109 = vmatmul.f32.gmra.mxu0 %v84
    %v110 = vpop.f32.mrf.mxu0
    %v111 = vadd.f32 %v78, %v110
    %112 = vdwg.mxu0
    %v113 = vld [vmem:[%s3] sm:$0xff]
    %v114 = vld [vmem:[%s3 + $0x8] sm:$0xff]
    %v115 = vld [vmem:[%s3 + $0x10] sm:$0xff]
    %v116 = vld [vmem:[%s3 + $0x18] sm:$0xff]
    %v117 = vld [vmem:[%s3 + $0x20] sm:$0xff]
    %v118 = vld [vmem:[%s3 + $0x28] sm:$0xff]
    %v119 = vld [vmem:[%s3 + $0x30] sm:$0xff]
    %v120 = vld [vmem:[%s3 + $0x38] sm:$0xff]
    %vm121 = vcmask 261120
    %v123 = vsel %vm121, %v108, 0
    %v126 = vsel %vm121, %v111, 0
    %128 = vmatpush.msra.mxu0 0.0
    %129 = vmatpush.msra.mxu0 0.0
    %130 = vmatpush.msra.mxu0 0.0
    %131 = vmatpush.msra.mxu0 0.0
    %132 = vmatpush.msra.mxu0 0.0
    %133 = vmatpush.msra.mxu0 0.0
    %134 = vmatpush.msra.mxu0 0.0
    %135 = vmatpush.msra.mxu0 0.0
    %136 = vmatpush.msra.mxu0 0.0
    %137 = vmatpush.msra.mxu0 0.0
    %138 = vmatpush.msra.mxu0 0.0
    %139 = vmatpush.msra.mxu0 0.0
    %140 = vmatpush.msra.mxu0 %v119
    %141 = vmatpush.msra.mxu0 %v117
    %142 = vmatpush.msra.mxu0 %v115
    %143 = vmatpush.msra.mxu0 %v113
    %144 = vmatmul.f32.gmra.mxu0 %v123
    %v145 = vpop.f32.mrf.mxu0
    %v146 = vadd.f32 0.0, %v145
    %147 = vmatmul.f32.gmra.mxu0 %v126
    %v148 = vpop.f32.mrf.mxu0
    %v149 = vadd.f32 0.0, %v148
    %150 = vdwg.mxu0
    %151 = vmatpush.msra.mxu0 0.0
    %152 = vmatpush.msra.mxu0 0.0
    %153 = vmatpush.msra.mxu0 0.0
    %154 = vmatpush.msra.mxu0 0.0
    %155 = vmatpush.msra.mxu0 0.0
    %156 = vmatpush.msra.mxu0 0.0
    %157 = vmatpush.msra.mxu0 0.0
    %158 = vmatpush.msra.mxu0 0.0
    %159 = vmatpush.msra.mxu0 0.0
    %160 = vmatpush.msra.mxu0 0.0
    %161 = vmatpush.msra.mxu0 0.0
    %162 = vmatpush.msra.mxu0 0.0
    %163 = vmatpush.msra.mxu0 %v120
    %164 = vmatpush.msra.mxu0 %v118
    %165 = vmatpush.msra.mxu0 %v116
    %166 = vmatpush.msra.mxu0 %v114
    %167 = vmatmul.f32.gmra.mxu0 %v123
    %v168 = vpop.f32.mrf.mxu0
    %v169 = vadd.f32 0.0, %v168
    %170 = vmatmul.f32.gmra.mxu0 %v126
    %v171 = vpop.f32.mrf.mxu0
    %v172 = vadd.f32 0.0, %v171
    %173 = vdwg.mxu0
    %175 = vrot.lane.b32.xlu0 %v146, 64
    %v176 = vpop.permute.xlu0 %175
    %v177 = vsel %vm121, %v146, 0
    %v179 = vsel %vm121, %v176, 0
    %181 = vmatpush.xpose.msra.mxu0 0.0
    %182 = vmatpush.xpose.msra.mxu0 0.0
    %183 = vmatpush.xpose.msra.mxu0 0.0
    %184 = vmatpush.xpose.msra.mxu0 0.0
    %185 = vmatpush.xpose.msra.mxu0 0.0
    %186 = vmatpush.xpose.msra.mxu0 0.0
    %187 = vmatpush.xpose.msra.mxu0 0.0
    %188 = vmatpush.xpose.msra.mxu0 0.0
    %189 = vmatpush.xpose.msra.mxu0 0.0
    %190 = vmatpush.xpose.msra.mxu0 0.0
    %191 = vmatpush.xpose.msra.mxu0 0.0
    %192 = vmatpush.xpose.msra.mxu0 0.0
    %193 = vmatpush.xpose.msra.mxu0 0.0
    %194 = vmatpush.xpose.msra.mxu0 0.0
    %195 = vmatpush.xpose.msra.mxu0 0.0
    %196 = vmatpush.xpose.msra.mxu0 %v179
    %197 = vmatmul.f32.gmra.mxu0 %v177
    %v198 = vpop.f32.mrf.mxu0
    %v199 = vadd.f32 0.0, %v198
    %200 = vdwg.mxu0
    %v201 = vmul.f32 %v199, 0.17677669
    %vm202 = vcmask 64512
    %v203 = vsel %vm202, %v201, -inf
    %204 = vmax.xlane.f32.xlu0 %v203
    %v205 = vpop.xlane.xlu0 %204
    %v206 = vsub.f32 %v201, %v205
    %v207 = vmul.f32 %v206, 1.442695
    %v208 = vpow.pop %v207
    %v209 = vsel %vm202, %v208, 0.0
    %210 = vadd.xlane.f32.xlu0 %v209
    %v211 = vpop.xlane.xlu0 %210
    %v212 = vrcp.pop %v211
    %v213 = vmul.f32 %v211, %v212
    %v214 = vsub.f32 1.0, %v213
    %v215 = vmul.f32 %v212, %v214
    %v216 = vadd.f32 %v212, %v215
    %vm217 = vweird.f32 %v211
    %vm218 = vweird.f32 %v212
    %vm219 = vmor %vm217, %vm218
    %v220 = vsel %vm219, %v212, %v216
    %v221 = vand.u32 2147483647, %v211
    %vm222 = vcmp.eq.f32.partialorder %v221, 8.507059e+37
    %v223 = vand.u32 %v211, 2147483648
    %v224 = vor.u32 1.1754944e-38, %v223
    %v225 = vsel %vm222, %v224, %v220
    %v226 = vmul.f32 %v208, %v225
    %v227 = vadd.f32 %v226, 0.0
    %v229 = vsel %vm202, %v226, 0
    %231 = vmatpush.msra.mxu0 0.0
    %232 = vmatpush.msra.mxu0 0.0
    %233 = vmatpush.msra.mxu0 0.0
    %234 = vmatpush.msra.mxu0 0.0
    %235 = vmatpush.msra.mxu0 0.0
    %236 = vmatpush.msra.mxu0 0.0
    %237 = vmatpush.msra.mxu0 0.0
    %238 = vmatpush.msra.mxu0 0.0
    %239 = vmatpush.msra.mxu0 0.0
    %240 = vmatpush.msra.mxu0 0.0
    %241 = vmatpush.msra.mxu0 0.0
    %242 = vmatpush.msra.mxu0 0.0
    %243 = vmatpush.msra.mxu0 0.0
    %244 = vmatpush.msra.mxu0 0.0
    %245 = vmatpush.msra.mxu0 0.0
    %246 = vmatpush.msra.mxu0 %v169
    %247 = vmatmul.f32.gmra.mxu0 %v229
    %v248 = vpop.f32.mrf.mxu0
    %v249 = vadd.f32 0.0, %v248
    %250 = vdwg.mxu0
    %251 = vrot.lane.b32.xlu0 %v146, 96
    %v252 = vpop.permute.xlu0 %251
    %253 = vrot.lane.b32.xlu0 %v146, 32
    %v254 = vpop.permute.xlu0 %253
    %v255 = vsel %vm121, %v252, 0
    %v257 = vsel %vm121, %v254, 0
    %259 = vmatpush.xpose.msra.mxu0 0.0
    %260 = vmatpush.xpose.msra.mxu0 0.0
    %261 = vmatpush.xpose.msra.mxu0 0.0
    %262 = vmatpush.xpose.msra.mxu0 0.0
    %263 = vmatpush.xpose.msra.mxu0 0.0
    %264 = vmatpush.xpose.msra.mxu0 0.0
    %265 = vmatpush.xpose.msra.mxu0 0.0
    %266 = vmatpush.xpose.msra.mxu0 0.0
    %267 = vmatpush.xpose.msra.mxu0 0.0
    %268 = vmatpush.xpose.msra.mxu0 0.0
    %269 = vmatpush.xpose.msra.mxu0 0.0
    %270 = vmatpush.xpose.msra.mxu0 0.0
    %271 = vmatpush.xpose.msra.mxu0 0.0
    %272 = vmatpush.xpose.msra.mxu0 0.0
    %273 = vmatpush.xpose.msra.mxu0 0.0
    %274 = vmatpush.xpose.msra.mxu0 %v257
    %275 = vmatmul.f32.gmra.mxu0 %v255
    %v276 = vpop.f32.mrf.mxu0
    %v277 = vadd.f32 0.0, %v276
    %278 = vdwg.mxu0
    %v279 = vmul.f32 %v277, 0.17677669
    %v280 = vsel %vm202, %v279, -inf
    %281 = vmax.xlane.f32.xlu0 %v280
    %v282 = vpop.xlane.xlu0 %281
    %v283 = vsub.f32 %v279, %v282
    %v284 = vmul.f32 %v283, 1.442695
    %v285 = vpow.pop %v284
    %v286 = vsel %vm202, %v285, 0.0
    %287 = vadd.xlane.f32.xlu0 %v286
    %v288 = vpop.xlane.xlu0 %287
    %v289 = vrcp.pop %v288
    %v290 = vmul.f32 %v288, %v289
    %v291 = vsub.f32 1.0, %v290
    %v292 = vmul.f32 %v289, %v291
    %v293 = vadd.f32 %v289, %v292
    %vm294 = vweird.f32 %v288
    %vm295 = vweird.f32 %v289
    %vm296 = vmor %vm294, %vm295
    %v297 = vsel %vm296, %v289, %v293
    %v298 = vand.u32 2147483647, %v288
    %vm299 = vcmp.eq.f32.partialorder %v298, 8.507059e+37
    %v300 = vand.u32 %v288, 2147483648
    %v301 = vor.u32 1.1754944e-38, %v300
    %v302 = vsel %vm299, %v301, %v297
    %v303 = vmul.f32 %v285, %v302
    %v304 = vadd.f32 %v227, %v303
    %306 = vrot.lane.b32.xlu0 %v169, 96
    %v307 = vpop.permute.xlu0 %306
    %v310 = vsel %vm202, %v303, 0
    %312 = vmatpush.msra.mxu0 0.0
    %313 = vmatpush.msra.mxu0 0.0
    %314 = vmatpush.msra.mxu0 0.0
    %315 = vmatpush.msra.mxu0 0.0
    %316 = vmatpush.msra.mxu0 0.0
    %317 = vmatpush.msra.mxu0 0.0
    %318 = vmatpush.msra.mxu0 0.0
    %319 = vmatpush.msra.mxu0 0.0
    %320 = vmatpush.msra.mxu0 0.0
    %321 = vmatpush.msra.mxu0 0.0
    %322 = vmatpush.msra.mxu0 0.0
    %323 = vmatpush.msra.mxu0 0.0
    %324 = vmatpush.msra.mxu0 0.0
    %325 = vmatpush.msra.mxu0 0.0
    %326 = vmatpush.msra.mxu0 0.0
    %327 = vmatpush.msra.mxu0 %v307
    %328 = vmatmul.f32.gmra.mxu0 %v310
    %v329 = vpop.f32.mrf.mxu0
    %v330 = vadd.f32 0.0, %v329
    %331 = vdwg.mxu0
    %333 = vrot.lane.b32.xlu0 %v330, 32
    %v334 = vpop.permute.xlu0 %333
    %v336 = vsel %vm121, %v249, %v334
    %338 = vrot.lane.b32.xlu0 %v149, 64
    %v339 = vpop.permute.xlu0 %338
    %v340 = vsel %vm121, %v149, 0
    %v342 = vsel %vm121, %v339, 0
    %344 = vmatpush.xpose.msra.mxu0 0.0
    %345 = vmatpush.xpose.msra.mxu0 0.0
    %346 = vmatpush.xpose.msra.mxu0 0.0
    %347 = vmatpush.xpose.msra.mxu0 0.0
    %348 = vmatpush.xpose.msra.mxu0 0.0
    %349 = vmatpush.xpose.msra.mxu0 0.0
    %350 = vmatpush.xpose.msra.mxu0 0.0
    %351 = vmatpush.xpose.msra.mxu0 0.0
    %352 = vmatpush.xpose.msra.mxu0 0.0
    %353 = vmatpush.xpose.msra.mxu0 0.0
    %354 = vmatpush.xpose.msra.mxu0 0.0
    %355 = vmatpush.xpose.msra.mxu0 0.0
    %356 = vmatpush.xpose.msra.mxu0 0.0
    %357 = vmatpush.xpose.msra.mxu0 0.0
    %358 = vmatpush.xpose.msra.mxu0 0.0
    %359 = vmatpush.xpose.msra.mxu0 %v342
    %360 = vmatmul.f32.gmra.mxu0 %v340
    %v361 = vpop.f32.mrf.mxu0
    %v362 = vadd.f32 0.0, %v361
    %363 = vdwg.mxu0
    %v364 = vmul.f32 %v362, 0.17677669
    %v365 = vsel %vm202, %v364, -inf
    %366 = vmax.xlane.f32.xlu0 %v365
    %v367 = vpop.xlane.xlu0 %366
    %v368 = vsub.f32 %v364, %v367
    %v369 = vmul.f32 %v368, 1.442695
    %v370 = vpow.pop %v369
    %v371 = vsel %vm202, %v370, 0.0
    %372 = vadd.xlane.f32.xlu0 %v371
    %v373 = vpop.xlane.xlu0 %372
    %v374 = vrcp.pop %v373
    %v375 = vmul.f32 %v373, %v374
    %v376 = vsub.f32 1.0, %v375
    %v377 = vmul.f32 %v374, %v376
    %v378 = vadd.f32 %v374, %v377
    %vm379 = vweird.f32 %v373
    %vm380 = vweird.f32 %v374
    %vm381 = vmor %vm379, %vm380
    %v382 = vsel %vm381, %v374, %v378
    %v383 = vand.u32 2147483647, %v373
    %vm384 = vcmp.eq.f32.partialorder %v383, 8.507059e+37
    %v385 = vand.u32 %v373, 2147483648
    %v386 = vor.u32 1.1754944e-38, %v385
    %v387 = vsel %vm384, %v386, %v382
    %v388 = vmul.f32 %v370, %v387
    %v389 = vadd.f32 %v388, 0.0
    %v391 = vsel %vm202, %v388, 0
    %393 = vmatpush.msra.mxu0 0.0
    %394 = vmatpush.msra.mxu0 0.0
    %395 = vmatpush.msra.mxu0 0.0
    %396 = vmatpush.msra.mxu0 0.0
    %397 = vmatpush.msra.mxu0 0.0
    %398 = vmatpush.msra.mxu0 0.0
    %399 = vmatpush.msra.mxu0 0.0
    %400 = vmatpush.msra.mxu0 0.0
    %401 = vmatpush.msra.mxu0 0.0
    %402 = vmatpush.msra.mxu0 0.0
    %403 = vmatpush.msra.mxu0 0.0
    %404 = vmatpush.msra.mxu0 0.0
    %405 = vmatpush.msra.mxu0 0.0
    %406 = vmatpush.msra.mxu0 0.0
    %407 = vmatpush.msra.mxu0 0.0
    %408 = vmatpush.msra.mxu0 %v172
    %409 = vmatmul.f32.gmra.mxu0 %v391
    %v410 = vpop.f32.mrf.mxu0
    %v411 = vadd.f32 0.0, %v410
    %412 = vdwg.mxu0
    %413 = vrot.lane.b32.xlu0 %v149, 96
    %v414 = vpop.permute.xlu0 %413
    %415 = vrot.lane.b32.xlu0 %v149, 32
    %v416 = vpop.permute.xlu0 %415
    %v417 = vsel %vm121, %v414, 0
    %v419 = vsel %vm121, %v416, 0
    %421 = vmatpush.xpose.msra.mxu0 0.0
    %422 = vmatpush.xpose.msra.mxu0 0.0
    %423 = vmatpush.xpose.msra.mxu0 0.0
    %424 = vmatpush.xpose.msra.mxu0 0.0
    %425 = vmatpush.xpose.msra.mxu0 0.0
    %426 = vmatpush.xpose.msra.mxu0 0.0
    %427 = vmatpush.xpose.msra.mxu0 0.0
    %428 = vmatpush.xpose.msra.mxu0 0.0
    %429 = vmatpush.xpose.msra.mxu0 0.0
    %430 = vmatpush.xpose.msra.mxu0 0.0
    %431 = vmatpush.xpose.msra.mxu0 0.0
    %432 = vmatpush.xpose.msra.mxu0 0.0
    %433 = vmatpush.xpose.msra.mxu0 0.0
    %434 = vmatpush.xpose.msra.mxu0 0.0
    %435 = vmatpush.xpose.msra.mxu0 0.0
    %436 = vmatpush.xpose.msra.mxu0 %v419
    %437 = vmatmul.f32.gmra.mxu0 %v417
    %v438 = vpop.f32.mrf.mxu0
    %v439 = vadd.f32 0.0, %v438
    %440 = vdwg.mxu0
    %v441 = vmul.f32 %v439, 0.17677669
    %v442 = vsel %vm202, %v441, -inf
    %443 = vmax.xlane.f32.xlu0 %v442
    %v444 = vpop.xlane.xlu0 %443
    %v445 = vsub.f32 %v441, %v444
    %v446 = vmul.f32 %v445, 1.442695
    %v447 = vpow.pop %v446
    %v448 = vsel %vm202, %v447, 0.0
    %449 = vadd.xlane.f32.xlu0 %v448
    %v450 = vpop.xlane.xlu0 %449
    %v451 = vrcp.pop %v450
    %v452 = vmul.f32 %v450, %v451
    %v453 = vsub.f32 1.0, %v452
    %v454 = vmul.f32 %v451, %v453
    %v455 = vadd.f32 %v451, %v454
    %vm456 = vweird.f32 %v450
    %vm457 = vweird.f32 %v451
    %vm458 = vmor %vm456, %vm457
    %v459 = vsel %vm458, %v451, %v455
    %v460 = vand.u32 2147483647, %v450
    %vm461 = vcmp.eq.f32.partialorder %v460, 8.507059e+37
    %v462 = vand.u32 %v450, 2147483648
    %v463 = vor.u32 1.1754944e-38, %v462
    %v464 = vsel %vm461, %v463, %v459
    %v465 = vmul.f32 %v447, %v464
    %v466 = vadd.f32 %v389, %v465
    %468 = vrot.lane.b32.xlu0 %v172, 96
    %v469 = vpop.permute.xlu0 %468
    %v472 = vsel %vm202, %v465, 0
    %474 = vmatpush.msra.mxu0 0.0
    %475 = vmatpush.msra.mxu0 0.0
    %476 = vmatpush.msra.mxu0 0.0
    %477 = vmatpush.msra.mxu0 0.0
    %478 = vmatpush.msra.mxu0 0.0
    %479 = vmatpush.msra.mxu0 0.0
    %480 = vmatpush.msra.mxu0 0.0
    %481 = vmatpush.msra.mxu0 0.0
    %482 = vmatpush.msra.mxu0 0.0
    %483 = vmatpush.msra.mxu0 0.0
    %484 = vmatpush.msra.mxu0 0.0
    %485 = vmatpush.msra.mxu0 0.0
    %486 = vmatpush.msra.mxu0 0.0
    %487 = vmatpush.msra.mxu0 0.0
    %488 = vmatpush.msra.mxu0 0.0
    %489 = vmatpush.msra.mxu0 %v469
    %490 = vmatmul.f32.gmra.mxu0 %v472
    %v491 = vpop.f32.mrf.mxu0
    %v492 = vadd.f32 0.0, %v491
    %493 = vdwg.mxu0
    %495 = vrot.lane.b32.xlu0 %v492, 32
    %v496 = vpop.permute.xlu0 %495
    %v498 = vsel %vm121, %v411, %v496
    %v499 = vld [vmem:[%s4] sm:$0xff]
    %v500 = vld [vmem:[%s4 + $0x8] sm:$0xff]
    %v501 = vld [vmem:[%s4 + $0x10] sm:$0xff]
    %v502 = vld [vmem:[%s4 + $0x18] sm:$0xff]
    %v503 = vld [vmem:[%s4 + $0x20] sm:$0xff]
    %v504 = vld [vmem:[%s4 + $0x28] sm:$0xff]
    %v505 = vld [vmem:[%s4 + $0x30] sm:$0xff]
    %v506 = vld [vmem:[%s4 + $0x38] sm:$0xff]
    %v507 = vld [vmem:[%s5] sm:$0x1]
    %v509 = vperm.slane %v507, 0
    %vm511 = vcmask 523264
    %v513 = vsel %vm511, %v336, 0
    %v516 = vsel %vm511, %v498, 0
    %518 = vmatpush.msra.mxu0 0.0
    %519 = vmatpush.msra.mxu0 0.0
    %520 = vmatpush.msra.mxu0 0.0
    %521 = vmatpush.msra.mxu0 0.0
    %522 = vmatpush.msra.mxu0 0.0
    %523 = vmatpush.msra.mxu0 0.0
    %524 = vmatpush.msra.mxu0 0.0
    %525 = vmatpush.msra.mxu0 0.0
    %526 = vmatpush.msra.mxu0 %v506
    %527 = vmatpush.msra.mxu0 %v505
    %528 = vmatpush.msra.mxu0 %v504
    %529 = vmatpush.msra.mxu0 %v503
    %530 = vmatpush.msra.mxu0 %v502
    %531 = vmatpush.msra.mxu0 %v501
    %532 = vmatpush.msra.mxu0 %v500
    %533 = vmatpush.msra.mxu0 %v499
    %534 = vmatmul.f32.gmra.mxu0 %v513
    %v535 = vpop.f32.mrf.mxu0
    %v536 = vadd.f32 %v509, %v535
    %537 = vmatmul.f32.gmra.mxu0 %v516
    %v538 = vpop.f32.mrf.mxu0
    %v539 = vadd.f32 %v509, %v538
    %540 = vdwg.mxu0
    %v541 = vadd.f32 %v536, %v108
    %v542 = vadd.f32 %v539, %v111
    %v543 = vld [vmem:[%s6] sm:$0x1]
    %v544 = vld [vmem:[%s7] sm:$0x1]
    %v545 = vsel %vm121, %v541, 0.0
    %546 = vadd.xlane.f32.xlu0 %v545
    %v547 = vpop.xlane.xlu0 %546
    %v548 = vsel %vm121, %v542, 0.0
    %549 = vadd.xlane.f32.xlu0 %v548
    %v550 = vpop.xlane.xlu0 %549
    %v551 = vrcp.pop 32.0
    %v552 = vmul.f32 32.0, %v551
    %v553 = vsub.f32 1.0, %v552
    %v554 = vmul.f32 %v551, %v553
    %v555 = vadd.f32 %v551, %v554
    %vm556 = vweird.f32 %v551
    %v557 = vsel %vm556, %v551, %v555
    %v558 = vmul.f32 %v547, %v557
    %v559 = vmul.f32 %v550, %v557
    %v560 = vsub.f32 %v541, %v558
    %v561 = vsub.f32 %v542, %v559
    %v562 = vmul.f32 %v560, %v560
    %v563 = vmul.f32 %v561, %v561
    %v564 = vsel %vm121, %v562, 0.0
    %565 = vadd.xlane.f32.xlu0 %v564
    %v566 = vpop.xlane.xlu0 %565
    %v567 = vsel %vm121, %v563, 0.0
    %568 = vadd.xlane.f32.xlu0 %v567
    %v569 = vpop.xlane.xlu0 %568
    %v570 = vmul.f32 %v566, %v557
    %v571 = vmul.f32 %v569, %v557
    %v572 = vadd.f32 %v570, 1e-05
    %v573 = vadd.f32 %v571, 1e-05
    %v574 = vrsqrt.pop %v572
    %v575 = vmul.f32 %v574, %v572
    %v576 = vmul.f32 %v575, %v574
    %v577 = vmul.f32 0.5, %v576
    %v578 = vsub.f32 1.5, %v577
    %v579 = vmul.f32 %v574, %v578
    %v580 = vmul.f32 %v572, %v579
    %vm581 = vcmp.eq.f32.partialorder %v572, inf
    %v582 = vsel %vm581, %v572, %v580
    %vm583 = vcmp.eq.f32.partialorder %v572, 0.0
    %v584 = vand.u32 %v572, 2147483648
    %v585 = vsel %vm583, %v584, %v582
    %v586 = vrsqrt.pop %v573
    %v587 = vmul.f32 %v586, %v573
    %v588 = vmul.f32 %v587, %v586
    %v589 = vmul.f32 0.5, %v588
    %v590 = vsub.f32 1.5, %v589
    %v591 = vmul.f32 %v586, %v590
    %v592 = vmul.f32 %v573, %v591
    %vm593 = vcmp.eq.f32.partialorder %v573, inf
    %v594 = vsel %vm593, %v573, %v592
    %vm595 = vcmp.eq.f32.partialorder %v573, 0.0
    %v596 = vand.u32 %v573, 2147483648
    %v597 = vsel %vm595, %v596, %v594
    %v598 = vrcp.pop %v585
    %v599 = vmul.f32 %v585, %v598
    %v600 = vsub.f32 1.0, %v599
    %v601 = vmul.f32 %v598, %v600
    %v602 = vadd.f32 %v598, %v601
    %vm603 = vweird.f32 %v585
    %vm604 = vweird.f32 %v598
    %vm605 = vmor %vm603, %vm604
    %v606 = vsel %vm605, %v598, %v602
    %v607 = vand.u32 2147483647, %v585
    %vm608 = vcmp.eq.f32.partialorder %v607, 8.507059e+37
    %v609 = vand.u32 %v585, 2147483648
    %v610 = vor.u32 1.1754944e-38, %v609
    %v611 = vsel %vm608, %v610, %v606
    %v612 = vmul.f32 %v560, %v611
    %v613 = vrcp.pop %v597
    %v614 = vmul.f32 %v597, %v613
    %v615 = vsub.f32 1.0, %v614
    %v616 = vmul.f32 %v613, %v615
    %v617 = vadd.f32 %v613, %v616
    %vm618 = vweird.f32 %v597
    %vm619 = vweird.f32 %v613
    %vm620 = vmor %vm618, %vm619
    %v621 = vsel %vm620, %v613, %v617
    %v622 = vand.u32 2147483647, %v597
    %vm623 = vcmp.eq.f32.partialorder %v622, 8.507059e+37
    %v624 = vand.u32 %v597, 2147483648
    %v625 = vor.u32 1.1754944e-38, %v624
    %v626 = vsel %vm623, %v625, %v621
    %v627 = vmul.f32 %v561, %v626
    %v629 = vperm.slane %v543, 0
    %v631 = vmul.f32 %v612, %v629
    %v632 = vmul.f32 %v627, %v629
    %v634 = vperm.slane %v544, 0
    %v636 = vadd.f32 %v631, %v634
    %v637 = vadd.f32 %v632, %v634
    %v638 = vld [vmem:[%s8] sm:$0xff]
    %v639 = vld [vmem:[%s8 + $0x8] sm:$0xff]
    %v640 = vld [vmem:[%s8 + $0x10] sm:$0xff]
    %v641 = vld [vmem:[%s8 + $0x18] sm:$0xff]
    %v642 = vld [vmem:[%s9] sm:$0x1]
    %v644 = vperm.slane %v642, 0
    %v647 = vsel %vm121, %v636, 0
    %v650 = vsel %vm121, %v637, 0
    %652 = vmatpush.msra.mxu0 0.0
    %653 = vmatpush.msra.mxu0 0.0
    %654 = vmatpush.msra.mxu0 0.0
    %655 = vmatpush.msra.mxu0 0.0
    %656 = vmatpush.msra.mxu0 0.0
    %657 = vmatpush.msra.mxu0 0.0
    %658 = vmatpush.msra.mxu0 0.0
    %659 = vmatpush.msra.mxu0 0.0
    %660 = vmatpush.msra.mxu0 0.0
    %661 = vmatpush.msra.mxu0 0.0
    %662 = vmatpush.msra.mxu0 0.0
    %663 = vmatpush.msra.mxu0 0.0
    %664 = vmatpush.msra.mxu0 %v641
    %665 = vmatpush.msra.mxu0 %v640
    %666 = vmatpush.msra.mxu0 %v639
    %667 = vmatpush.msra.mxu0 %v638
    %668 = vmatmul.f32.gmra.mxu0 %v647
    %v669 = vpop.f32.mrf.mxu0
    %v670 = vadd.f32 %v644, %v669
    %671 = vmatmul.f32.gmra.mxu0 %v650
    %v672 = vpop.f32.mrf.mxu0
    %v673 = vadd.f32 %v644, %v672
    %674 = vdwg.mxu0
    %v675 = vmax.f32 %v670, 0.0
    %v676 = vmax.f32 %v673, 0.0
    %v677 = vld [vmem:[%s10] sm:$0xff]
    %v678 = vld [vmem:[%s10 + $0x8] sm:$0xff]
    %v679 = vld [vmem:[%s10 + $0x10] sm:$0xff]
    %v680 = vld [vmem:[%s10 + $0x18] sm:$0xff]
    %v681 = vld [vmem:[%s10 + $0x20] sm:$0xff]
    %v682 = vld [vmem:[%s10 + $0x28] sm:$0xff]
    %v683 = vld [vmem:[%s10 + $0x30] sm:$0xff]
    %v684 = vld [vmem:[%s10 + $0x38] sm:$0xff]
    %v685 = vld [vmem:[%s11] sm:$0x1]
    %v687 = vperm.slane %v685, 0
    %v690 = vsel %vm511, %v675, 0
    %v693 = vsel %vm511, %v676, 0
    %695 = vmatpush.msra.mxu0 0.0
    %696 = vmatpush.msra.mxu0 0.0
    %697 = vmatpush.msra.mxu0 0.0
    %698 = vmatpush.msra.mxu0 0.0
    %699 = vmatpush.msra.mxu0 0.0
    %700 = vmatpush.msra.mxu0 0.0
    %701 = vmatpush.msra.mxu0 0.0
    %702 = vmatpush.msra.mxu0 0.0
    %703 = vmatpush.msra.mxu0 %v684
    %704 = vmatpush.msra.mxu0 %v683
    %705 = vmatpush.msra.mxu0 %v682
    %706 = vmatpush.msra.mxu0 %v681
    %707 = vmatpush.msra.mxu0 %v680
    %708 = vmatpush.msra.mxu0 %v679
    %709 = vmatpush.msra.mxu0 %v678
    %710 = vmatpush.msra.mxu0 %v677
    %711 = vmatmul.f32.gmra.mxu0 %v690
    %v712 = vpop.f32.mrf.mxu0
    %v713 = vadd.f32 %v687, %v712
    %714 = vmatmul.f32.gmra.mxu0 %v693
    %v715 = vpop.f32.mrf.mxu0
    %v716 = vadd.f32 %v687, %v715
    %717 = vdwg.mxu0
    %v718 = vadd.f32 %v713, %v636
    %v719 = vadd.f32 %v716, %v637
    %v720 = vld [vmem:[%s12] sm:$0x1]
    %v721 = vld [vmem:[%s13] sm:$0x1]
    %v722 = vsel %vm121, %v718, 0.0
    %723 = vadd.xlane.f32.xlu0 %v722
    %v724 = vpop.xlane.xlu0 %723
    %v725 = vsel %vm121, %v719, 0.0
    %726 = vadd.xlane.f32.xlu0 %v725
    %v727 = vpop.xlane.xlu0 %726
    %v728 = vmul.f32 %v724, %v557
    %v729 = vmul.f32 %v727, %v557
    %v730 = vsub.f32 %v718, %v728
    %v731 = vsub.f32 %v719, %v729
    %v732 = vmul.f32 %v730, %v730
    %v733 = vmul.f32 %v731, %v731
    %v734 = vsel %vm121, %v732, 0.0
    %735 = vadd.xlane.f32.xlu0 %v734
    %v736 = vpop.xlane.xlu0 %735
    %v737 = vsel %vm121, %v733, 0.0
    %738 = vadd.xlane.f32.xlu0 %v737
    %v739 = vpop.xlane.xlu0 %738
    %v740 = vmul.f32 %v736, %v557
    %v741 = vmul.f32 %v739, %v557
    %v742 = vadd.f32 %v740, 1e-05
    %v743 = vadd.f32 %v741, 1e-05
    %v744 = vrsqrt.pop %v742
    %v745 = vmul.f32 %v744, %v742
    %v746 = vmul.f32 %v745, %v744
    %v747 = vmul.f32 0.5, %v746
    %v748 = vsub.f32 1.5, %v747
    %v749 = vmul.f32 %v744, %v748
    %v750 = vmul.f32 %v742, %v749
    %vm751 = vcmp.eq.f32.partialorder %v742, inf
    %v752 = vsel %vm751, %v742, %v750
    %vm753 = vcmp.eq.f32.partialorder %v742, 0.0
    %v754 = vand.u32 %v742, 2147483648
    %v755 = vsel %vm753, %v754, %v752
    %v756 = vrsqrt.pop %v743
    %v757 = vmul.f32 %v756, %v743
    %v758 = vmul.f32 %v757, %v756
    %v759 = vmul.f32 0.5, %v758
    %v760 = vsub.f32 1.5, %v759
    %v761 = vmul.f32 %v756, %v760
    %v762 = vmul.f32 %v743, %v761
    %vm763 = vcmp.eq.f32.partialorder %v743, inf
    %v764 = vsel %vm763, %v743, %v762
    %vm765 = vcmp.eq.f32.partialorder %v743, 0.0
    %v766 = vand.u32 %v743, 2147483648
    %v767 = vsel %vm765, %v766, %v764
    %v768 = vrcp.pop %v755
    %v769 = vmul.f32 %v755, %v768
    %v770 = vsub.f32 1.0, %v769
    %v771 = vmul.f32 %v768, %v770
    %v772 = vadd.f32 %v768, %v771
    %vm773 = vweird.f32 %v755
    %vm774 = vweird.f32 %v768
    %vm775 = vmor %vm773, %vm774
    %v776 = vsel %vm775, %v768, %v772
    %v777 = vand.u32 2147483647, %v755
    %vm778 = vcmp.eq.f32.partialorder %v777, 8.507059e+37
    %v779 = vand.u32 %v755, 2147483648
    %v780 = vor.u32 1.1754944e-38, %v779
    %v781 = vsel %vm778, %v780, %v776
    %v782 = vmul.f32 %v730, %v781
    %v783 = vrcp.pop %v767
    %v784 = vmul.f32 %v767, %v783
    %v785 = vsub.f32 1.0, %v784
    %v786 = vmul.f32 %v783, %v785
    %v787 = vadd.f32 %v783, %v786
    %vm788 = vweird.f32 %v767
    %vm789 = vweird.f32 %v783
    %vm790 = vmor %vm788, %vm789
    %v791 = vsel %vm790, %v783, %v787
    %v792 = vand.u32 2147483647, %v767
    %vm793 = vcmp.eq.f32.partialorder %v792, 8.507059e+37
    %v794 = vand.u32 %v767, 2147483648
    %v795 = vor.u32 1.1754944e-38, %v794
    %v796 = vsel %vm793, %v795, %v791
    %v797 = vmul.f32 %v731, %v796
    %v799 = vperm.slane %v720, 0
    %v801 = vmul.f32 %v782, %v799
    %v802 = vmul.f32 %v797, %v799
    %v804 = vperm.slane %v721, 0
    %v806 = vadd.f32 %v801, %v804
    %v807 = vadd.f32 %v802, %v804
    %s808 = scalar_lea.vmem %s3, 64
    %v809 = vld [vmem:[%s808] sm:$0xff]
    %v810 = vld [vmem:[%s808 + $0x8] sm:$0xff]
    %v811 = vld [vmem:[%s808 + $0x10] sm:$0xff]
    %v812 = vld [vmem:[%s808 + $0x18] sm:$0xff]
    %v813 = vld [vmem:[%s808 + $0x20] sm:$0xff]
    %v814 = vld [vmem:[%s808 + $0x28] sm:$0xff]
    %v815 = vld [vmem:[%s808 + $0x30] sm:$0xff]
    %v816 = vld [vmem:[%s808 + $0x38] sm:$0xff]
    %v818 = vsel %vm121, %v806, 0
    %v821 = vsel %vm121, %v807, 0
    %823 = vmatpush.msra.mxu0 0.0
    %824 = vmatpush.msra.mxu0 0.0
    %825 = vmatpush.msra.mxu0 0.0
    %826 = vmatpush.msra.mxu0 0.0
    %827 = vmatpush.msra.mxu0 0.0
    %828 = vmatpush.msra.mxu0 0.0
    %829 = vmatpush.msra.mxu0 0.0
    %830 = vmatpush.msra.mxu0 0.0
    %831 = vmatpush.msra.mxu0 0.0
    %832 = vmatpush.msra.mxu0 0.0
    %833 = vmatpush.msra.mxu0 0.0
    %834 = vmatpush.msra.mxu0 0.0
    %835 = vmatpush.msra.mxu0 %v815
    %836 = vmatpush.msra.mxu0 %v813
    %837 = vmatpush.msra.mxu0 %v811
    %838 = vmatpush.msra.mxu0 %v809
    %839 = vmatmul.f32.gmra.mxu0 %v818
    %v840 = vpop.f32.mrf.mxu0
    %v841 = vadd.f32 0.0, %v840
    %842 = vmatmul.f32.gmra.mxu0 %v821
    %v843 = vpop.f32.mrf.mxu0
    %v844 = vadd.f32 0.0, %v843
    %845 = vdwg.mxu0
    %846 = vmatpush.msra.mxu0 0.0
    %847 = vmatpush.msra.mxu0 0.0
    %848 = vmatpush.msra.mxu0 0.0
    %849 = vmatpush.msra.mxu0 0.0
    %850 = vmatpush.msra.mxu0 0.0
    %851 = vmatpush.msra.mxu0 0.0
    %852 = vmatpush.msra.mxu0 0.0
    %853 = vmatpush.msra.mxu0 0.0
    %854 = vmatpush.msra.mxu0 0.0
    %855 = vmatpush.msra.mxu0 0.0
    %856 = vmatpush.msra.mxu0 0.0
    %857 = vmatpush.msra.mxu0 0.0
    %858 = vmatpush.msra.mxu0 %v816
    %859 = vmatpush.msra.mxu0 %v814
    %860 = vmatpush.msra.mxu0 %v812
    %861 = vmatpush.msra.mxu0 %v810
    %862 = vmatmul.f32.gmra.mxu0 %v818
    %v863 = vpop.f32.mrf.mxu0
    %v864 = vadd.f32 0.0, %v863
    %865 = vmatmul.f32.gmra.mxu0 %v821
    %v866 = vpop.f32.mrf.mxu0
    %v867 = vadd.f32 0.0, %v866
    %868 = vdwg.mxu0
    %870 = vrot.lane.b32.xlu0 %v841, 64
    %v871 = vpop.permute.xlu0 %870
    %v872 = vsel %vm121, %v841, 0
    %v874 = vsel %vm121, %v871, 0
    %876 = vmatpush.xpose.msra.mxu0 0.0
    %877 = vmatpush.xpose.msra.mxu0 0.0
    %878 = vmatpush.xpose.msra.mxu0 0.0
    %879 = vmatpush.xpose.msra.mxu0 0.0
    %880 = vmatpush.xpose.msra.mxu0 0.0
    %881 = vmatpush.xpose.msra.mxu0 0.0
    %882 = vmatpush.xpose.msra.mxu0 0.0
    %883 = vmatpush.xpose.msra.mxu0 0.0
    %884 = vmatpush.xpose.msra.mxu0 0.0
    %885 = vmatpush.xpose.msra.mxu0 0.0
    %886 = vmatpush.xpose.msra.mxu0 0.0
    %887 = vmatpush.xpose.msra.mxu0 0.0
    %888 = vmatpush.xpose.msra.mxu0 0.0
    %889 = vmatpush.xpose.msra.mxu0 0.0
    %890 = vmatpush.xpose.msra.mxu0 0.0
    %891 = vmatpush.xpose.msra.mxu0 %v874
    %892 = vmatmul.f32.gmra.mxu0 %v872
    %v893 = vpop.f32.mrf.mxu0
    %v894 = vadd.f32 0.0, %v893
    %895 = vdwg.mxu0
    %v896 = vmul.f32 %v894, 0.17677669
    %v897 = vsel %vm202, %v896, -inf
    %898 = vmax.xlane.f32.xlu0 %v897
    %v899 = vpop.xlane.xlu0 %898
    %v900 = vsub.f32 %v896, %v899
    %v901 = vmul.f32 %v900, 1.442695
    %v902 = vpow.pop %v901
    %v903 = vsel %vm202, %v902, 0.0
    %904 = vadd.xlane.f32.xlu0 %v903
    %v905 = vpop.xlane.xlu0 %904
    %v906 = vrcp.pop %v905
    %v907 = vmul.f32 %v905, %v906
    %v908 = vsub.f32 1.0, %v907
    %v909 = vmul.f32 %v906, %v908
    %v910 = vadd.f32 %v906, %v909
    %vm911 = vweird.f32 %v905
    %vm912 = vweird.f32 %v906
    %vm913 = vmor %vm911, %vm912
    %v914 = vsel %vm913, %v906, %v910
    %v915 = vand.u32 2147483647, %v905
    %vm916 = vcmp.eq.f32.partialorder %v915, 8.507059e+37
    %v917 = vand.u32 %v905, 2147483648
    %v918 = vor.u32 1.1754944e-38, %v917
    %v919 = vsel %vm916, %v918, %v914
    %v920 = vmul.f32 %v902, %v919
    %v921 = vadd.f32 %v304, %v920
    %v923 = vsel %vm202, %v920, 0
    %925 = vmatpush.msra.mxu0 0.0
    %926 = vmatpush.msra.mxu0 0.0
    %927 = vmatpush.msra.mxu0 0.0
    %928 = vmatpush.msra.mxu0 0.0
    %929 = vmatpush.msra.mxu0 0.0
    %930 = vmatpush.msra.mxu0 0.0
    %931 = vmatpush.msra.mxu0 0.0
    %932 = vmatpush.msra.mxu0 0.0
    %933 = vmatpush.msra.mxu0 0.0
    %934 = vmatpush.msra.mxu0 0.0
    %935 = vmatpush.msra.mxu0 0.0
    %936 = vmatpush.msra.mxu0 0.0
    %937 = vmatpush.msra.mxu0 0.0
    %938 = vmatpush.msra.mxu0 0.0
    %939 = vmatpush.msra.mxu0 0.0
    %940 = vmatpush.msra.mxu0 %v864
    %941 = vmatmul.f32.gmra.mxu0 %v923
    %v942 = vpop.f32.mrf.mxu0
    %v943 = vadd.f32 0.0, %v942
    %944 = vdwg.mxu0
    %945 = vrot.lane.b32.xlu0 %v841, 96
    %v946 = vpop.permute.xlu0 %945
    %947 = vrot.lane.b32.xlu0 %v841, 32
    %v948 = vpop.permute.xlu0 %947
    %v949 = vsel %vm121, %v946, 0
    %v951 = vsel %vm121, %v948, 0
    %953 = vmatpush.xpose.msra.mxu0 0.0
    %954 = vmatpush.xpose.msra.mxu0 0.0
    %955 = vmatpush.xpose.msra.mxu0 0.0
    %956 = vmatpush.xpose.msra.mxu0 0.0
    %957 = vmatpush.xpose.msra.mxu0 0.0
    %958 = vmatpush.xpose.msra.mxu0 0.0
    %959 = vmatpush.xpose.msra.mxu0 0.0
    %960 = vmatpush.xpose.msra.mxu0 0.0
    %961 = vmatpush.xpose.msra.mxu0 0.0
    %962 = vmatpush.xpose.msra.mxu0 0.0
    %963 = vmatpush.xpose.msra.mxu0 0.0
    %964 = vmatpush.xpose.msra.mxu0 0.0
    %965 = vmatpush.xpose.msra.mxu0 0.0
    %966 = vmatpush.xpose.msra.mxu0 0.0
    %967 = vmatpush.xpose.msra.mxu0 0.0
    %968 = vmatpush.xpose.msra.mxu0 %v951
    %969 = vmatmul.f32.gmra.mxu0 %v949
    %v970 = vpop.f32.mrf.mxu0
    %v971 = vadd.f32 0.0, %v970
    %972 = vdwg.mxu0
    %v973 = vmul.f32 %v971, 0.17677669
    %v974 = vsel %vm202, %v973, -inf
    %975 = vmax.xlane.f32.xlu0 %v974
    %v976 = vpop.xlane.xlu0 %975
    %v977 = vsub.f32 %v973, %v976
    %v978 = vmul.f32 %v977, 1.442695
    %v979 = vpow.pop %v978
    %v980 = vsel %vm202, %v979, 0.0
    %981 = vadd.xlane.f32.xlu0 %v980
    %v982 = vpop.xlane.xlu0 %981
    %v983 = vrcp.pop %v982
    %v984 = vmul.f32 %v982, %v983
    %v985 = vsub.f32 1.0, %v984
    %v986 = vmul.f32 %v983, %v985
    %v987 = vadd.f32 %v983, %v986
    %vm988 = vweird.f32 %v982
    %vm989 = vweird.f32 %v983
    %vm990 = vmor %vm988, %vm989
    %v991 = vsel %vm990, %v983, %v987
    %v992 = vand.u32 2147483647, %v982
    %vm993 = vcmp.eq.f32.partialorder %v992, 8.507059e+37
    %v994 = vand.u32 %v982, 2147483648
    %v995 = vor.u32 1.1754944e-38, %v994
    %v996 = vsel %vm993, %v995, %v991
    %v997 = vmul.f32 %v979, %v996
    %v998 = vadd.f32 %v921, %v997
    %1000 = vrot.lane.b32.xlu0 %v864, 96
    %v1001 = vpop.permute.xlu0 %1000
    %v1004 = vsel %vm202, %v997, 0
    %1006 = vmatpush.msra.mxu0 0.0
    %1007 = vmatpush.msra.mxu0 0.0
    %1008 = vmatpush.msra.mxu0 0.0
    %1009 = vmatpush.msra.mxu0 0.0
    %1010 = vmatpush.msra.mxu0 0.0
    %1011 = vmatpush.msra.mxu0 0.0
    %1012 = vmatpush.msra.mxu0 0.0
    %1013 = vmatpush.msra.mxu0 0.0
    %1014 = vmatpush.msra.mxu0 0.0
    %1015 = vmatpush.msra.mxu0 0.0
    %1016 = vmatpush.msra.mxu0 0.0
    %1017 = vmatpush.msra.mxu0 0.0
    %1018 = vmatpush.msra.mxu0 0.0
    %1019 = vmatpush.msra.mxu0 0.0
    %1020 = vmatpush.msra.mxu0 0.0
    %1021 = vmatpush.msra.mxu0 %v1001
    %1022 = vmatmul.f32.gmra.mxu0 %v1004
    %v1023 = vpop.f32.mrf.mxu0
    %v1024 = vadd.f32 0.0, %v1023
    %1025 = vdwg.mxu0
    %1027 = vrot.lane.b32.xlu0 %v1024, 32
    %v1028 = vpop.permute.xlu0 %1027
    %v1030 = vsel %vm121, %v943, %v1028
    %1032 = vrot.lane.b32.xlu0 %v844, 64
    %v1033 = vpop.permute.xlu0 %1032
    %v1034 = vsel %vm121, %v844, 0
    %v1036 = vsel %vm121, %v1033, 0
    %1038 = vmatpush.xpose.msra.mxu0 0.0
    %1039 = vmatpush.xpose.msra.mxu0 0.0
    %1040 = vmatpush.xpose.msra.mxu0 0.0
    %1041 = vmatpush.xpose.msra.mxu0 0.0
    %1042 = vmatpush.xpose.msra.mxu0 0.0
    %1043 = vmatpush.xpose.msra.mxu0 0.0
    %1044 = vmatpush.xpose.msra.mxu0 0.0
    %1045 = vmatpush.xpose.msra.mxu0 0.0
    %1046 = vmatpush.xpose.msra.mxu0 0.0
    %1047 = vmatpush.xpose.msra.mxu0 0.0
    %1048 = vmatpush.xpose.msra.mxu0 0.0
    %1049 = vmatpush.xpose.msra.mxu0 0.0
    %1050 = vmatpush.xpose.msra.mxu0 0.0
    %1051 = vmatpush.xpose.msra.mxu0 0.0
    %1052 = vmatpush.xpose.msra.mxu0 0.0
    %1053 = vmatpush.xpose.msra.mxu0 %v1036
    %1054 = vmatmul.f32.gmra.mxu0 %v1034
    %v1055 = vpop.f32.mrf.mxu0
    %v1056 = vadd.f32 0.0, %v1055
    %1057 = vdwg.mxu0
    %v1058 = vmul.f32 %v1056, 0.17677669
    %v1059 = vsel %vm202, %v1058, -inf
    %1060 = vmax.xlane.f32.xlu0 %v1059
    %v1061 = vpop.xlane.xlu0 %1060
    %v1062 = vsub.f32 %v1058, %v1061
    %v1063 = vmul.f32 %v1062, 1.442695
    %v1064 = vpow.pop %v1063
    %v1065 = vsel %vm202, %v1064, 0.0
    %1066 = vadd.xlane.f32.xlu0 %v1065
    %v1067 = vpop.xlane.xlu0 %1066
    %v1068 = vrcp.pop %v1067
    %v1069 = vmul.f32 %v1067, %v1068
    %v1070 = vsub.f32 1.0, %v1069
    %v1071 = vmul.f32 %v1068, %v1070
    %v1072 = vadd.f32 %v1068, %v1071
    %vm1073 = vweird.f32 %v1067
    %vm1074 = vweird.f32 %v1068
    %vm1075 = vmor %vm1073, %vm1074
    %v1076 = vsel %vm1075, %v1068, %v1072
    %v1077 = vand.u32 2147483647, %v1067
    %vm1078 = vcmp.eq.f32.partialorder %v1077, 8.507059e+37
    %v1079 = vand.u32 %v1067, 2147483648
    %v1080 = vor.u32 1.1754944e-38, %v1079
    %v1081 = vsel %vm1078, %v1080, %v1076
    %v1082 = vmul.f32 %v1064, %v1081
    %v1083 = vadd.f32 %v466, %v1082
    %v1085 = vsel %vm202, %v1082, 0
    %1087 = vmatpush.msra.mxu0 0.0
    %1088 = vmatpush.msra.mxu0 0.0
    %1089 = vmatpush.msra.mxu0 0.0
    %1090 = vmatpush.msra.mxu0 0.0
    %1091 = vmatpush.msra.mxu0 0.0
    %1092 = vmatpush.msra.mxu0 0.0
    %1093 = vmatpush.msra.mxu0 0.0
    %1094 = vmatpush.msra.mxu0 0.0
    %1095 = vmatpush.msra.mxu0 0.0
    %1096 = vmatpush.msra.mxu0 0.0
    %1097 = vmatpush.msra.mxu0 0.0
    %1098 = vmatpush.msra.mxu0 0.0
    %1099 = vmatpush.msra.mxu0 0.0
    %1100 = vmatpush.msra.mxu0 0.0
    %1101 = vmatpush.msra.mxu0 0.0
    %1102 = vmatpush.msra.mxu0 %v867
    %1103 = vmatmul.f32.gmra.mxu0 %v1085
    %v1104 = vpop.f32.mrf.mxu0
    %v1105 = vadd.f32 0.0, %v1104
    %1106 = vdwg.mxu0
    %1107 = vrot.lane.b32.xlu0 %v844, 96
    %v1108 = vpop.permute.xlu0 %1107
    %1109 = vrot.lane.b32.xlu0 %v844, 32
    %v1110 = vpop.permute.xlu0 %1109
    %v1111 = vsel %vm121, %v1108, 0
    %v1113 = vsel %vm121, %v1110, 0
    %1115 = vmatpush.xpose.msra.mxu0 0.0
    %1116 = vmatpush.xpose.msra.mxu0 0.0
    %1117 = vmatpush.xpose.msra.mxu0 0.0
    %1118 = vmatpush.xpose.msra.mxu0 0.0
    %1119 = vmatpush.xpose.msra.mxu0 0.0
    %1120 = vmatpush.xpose.msra.mxu0 0.0
    %1121 = vmatpush.xpose.msra.mxu0 0.0
    %1122 = vmatpush.xpose.msra.mxu0 0.0
    %1123 = vmatpush.xpose.msra.mxu0 0.0
    %1124 = vmatpush.xpose.msra.mxu0 0.0
    %1125 = vmatpush.xpose.msra.mxu0 0.0
    %1126 = vmatpush.xpose.msra.mxu0 0.0
    %1127 = vmatpush.xpose.msra.mxu0 0.0
    %1128 = vmatpush.xpose.msra.mxu0 0.0
    %1129 = vmatpush.xpose.msra.mxu0 0.0
    %1130 = vmatpush.xpose.msra.mxu0 %v1113
    %1131 = vmatmul.f32.gmra.mxu0 %v1111
    %v1132 = vpop.f32.mrf.mxu0
    %v1133 = vadd.f32 0.0, %v1132
    %1134 = vdwg.mxu0
    %v1135 = vmul.f32 %v1133, 0.17677669
    %v1136 = vsel %vm202, %v1135, -inf
    %1137 = vmax.xlane.f32.xlu0 %v1136
    %v1138 = vpop.xlane.xlu0 %1137
    %v1139 = vsub.f32 %v1135, %v1138
    %v1140 = vmul.f32 %v1139, 1.442695
    %v1141 = vpow.pop %v1140
    %v1142 = vsel %vm202, %v1141, 0.0
    %1143 = vadd.xlane.f32.xlu0 %v1142
    %v1144 = vpop.xlane.xlu0 %1143
    %v1145 = vrcp.pop %v1144
    %v1146 = vmul.f32 %v1144, %v1145
    %v1147 = vsub.f32 1.0, %v1146
    %v1148 = vmul.f32 %v1145, %v1147
    %v1149 = vadd.f32 %v1145, %v1148
    %vm1150 = vweird.f32 %v1144
    %vm1151 = vweird.f32 %v1145
    %vm1152 = vmor %vm1150, %vm1151
    %v1153 = vsel %vm1152, %v1145, %v1149
    %v1154 = vand.u32 2147483647, %v1144
    %vm1155 = vcmp.eq.f32.partialorder %v1154, 8.507059e+37
    %v1156 = vand.u32 %v1144, 2147483648
    %v1157 = vor.u32 1.1754944e-38, %v1156
    %v1158 = vsel %vm1155, %v1157, %v1153
    %v1159 = vmul.f32 %v1141, %v1158
    %v1160 = vadd.f32 %v1083, %v1159
    %1162 = vrot.lane.b32.xlu0 %v867, 96
    %v1163 = vpop.permute.xlu0 %1162
    %v1166 = vsel %vm202, %v1159, 0
    %1168 = vmatpush.msra.mxu0 0.0
    %1169 = vmatpush.msra.mxu0 0.0
    %1170 = vmatpush.msra.mxu0 0.0
    %1171 = vmatpush.msra.mxu0 0.0
    %1172 = vmatpush.msra.mxu0 0.0
    %1173 = vmatpush.msra.mxu0 0.0
    %1174 = vmatpush.msra.mxu0 0.0
    %1175 = vmatpush.msra.mxu0 0.0
    %1176 = vmatpush.msra.mxu0 0.0
    %1177 = vmatpush.msra.mxu0 0.0
    %1178 = vmatpush.msra.mxu0 0.0
    %1179 = vmatpush.msra.mxu0 0.0
    %1180 = vmatpush.msra.mxu0 0.0
    %1181 = vmatpush.msra.mxu0 0.0
    %1182 = vmatpush.msra.mxu0 0.0
    %1183 = vmatpush.msra.mxu0 %v1163
    %1184 = vmatmul.f32.gmra.mxu0 %v1166
    %v1185 = vpop.f32.mrf.mxu0
    %v1186 = vadd.f32 0.0, %v1185
    %1187 = vdwg.mxu0
    %1189 = vrot.lane.b32.xlu0 %v1186, 32
    %v1190 = vpop.permute.xlu0 %1189
    %v1192 = vsel %vm121, %v1105, %v1190
    %s1193 = scalar_lea.vmem %s4, 64
    %v1194 = vld [vmem:[%s1193] sm:$0xff]
    %v1195 = vld [vmem:[%s1193 + $0x8] sm:$0xff]
    %v1196 = vld [vmem:[%s1193 + $0x10] sm:$0xff]
    %v1197 = vld [vmem:[%s1193 + $0x18] sm:$0xff]
    %v1198 = vld [vmem:[%s1193 + $0x20] sm:$0xff]
    %v1199 = vld [vmem:[%s1193 + $0x28] sm:$0xff]
    %v1200 = vld [vmem:[%s1193 + $0x30] sm:$0xff]
    %v1201 = vld [vmem:[%s1193 + $0x38] sm:$0xff]
    %s1202 = scalar_lea.vmem %s5, 1
    %v1203 = vld [vmem:[%s1202] sm:$0x1]
    %v1205 = vperm.slane %v1203, 0
    %v1208 = vsel %vm511, %v1030, 0
    %v1211 = vsel %vm511, %v1192, 0
    %1213 = vmatpush.msra.mxu0 0.0
    %1214 = vmatpush.msra.mxu0 0.0
    %1215 = vmatpush.msra.mxu0 0.0
    %1216 = vmatpush.msra.mxu0 0.0
    %1217 = vmatpush.msra.mxu0 0.0
    %1218 = vmatpush.msra.mxu0 0.0
    %1219 = vmatpush.msra.mxu0 0.0
    %1220 = vmatpush.msra.mxu0 0.0
    %1221 = vmatpush.msra.mxu0 %v1201
    %1222 = vmatpush.msra.mxu0 %v1200
    %1223 = vmatpush.msra.mxu0 %v1199
    %1224 = vmatpush.msra.mxu0 %v1198
    %1225 = vmatpush.msra.mxu0 %v1197
    %1226 = vmatpush.msra.mxu0 %v1196
    %1227 = vmatpush.msra.mxu0 %v1195
    %1228 = vmatpush.msra.mxu0 %v1194
    %1229 = vmatmul.f32.gmra.mxu0 %v1208
    %v1230 = vpop.f32.mrf.mxu0
    %v1231 = vadd.f32 %v1205, %v1230
    %1232 = vmatmul.f32.gmra.mxu0 %v1211
    %v1233 = vpop.f32.mrf.mxu0
    %v1234 = vadd.f32 %v1205, %v1233
    %1235 = vdwg.mxu0
    %v1236 = vadd.f32 %v1231, %v806
    %v1237 = vadd.f32 %v1234, %v807
    %s1238 = scalar_lea.vmem %s6, 1
    %v1239 = vld [vmem:[%s1238] sm:$0x1]
    %s1240 = scalar_lea.vmem %s7, 1
    %v1241 = vld [vmem:[%s1240] sm:$0x1]
    %v1242 = vsel %vm121, %v1236, 0.0
    %1243 = vadd.xlane.f32.xlu0 %v1242
    %v1244 = vpop.xlane.xlu0 %1243
    %v1245 = vsel %vm121, %v1237, 0.0
    %1246 = vadd.xlane.f32.xlu0 %v1245
    %v1247 = vpop.xlane.xlu0 %1246
    %v1248 = vmul.f32 %v1244, %v557
    %v1249 = vmul.f32 %v1247, %v557
    %v1250 = vsub.f32 %v1236, %v1248
    %v1251 = vsub.f32 %v1237, %v1249
    %v1252 = vmul.f32 %v1250, %v1250
    %v1253 = vmul.f32 %v1251, %v1251
    %v1254 = vsel %vm121, %v1252, 0.0
    %1255 = vadd.xlane.f32.xlu0 %v1254
    %v1256 = vpop.xlane.xlu0 %1255
    %v1257 = vsel %vm121, %v1253, 0.0
    %1258 = vadd.xlane.f32.xlu0 %v1257
    %v1259 = vpop.xlane.xlu0 %1258
    %v1260 = vmul.f32 %v1256, %v557
    %v1261 = vmul.f32 %v1259, %v557
    %v1262 = vadd.f32 %v1260, 1e-05
    %v1263 = vadd.f32 %v1261, 1e-05
    %v1264 = vrsqrt.pop %v1262
    %v1265 = vmul.f32 %v1264, %v1262
    %v1266 = vmul.f32 %v1265, %v1264
    %v1267 = vmul.f32 0.5, %v1266
    %v1268 = vsub.f32 1.5, %v1267
    %v1269 = vmul.f32 %v1264, %v1268
    %v1270 = vmul.f32 %v1262, %v1269
    %vm1271 = vcmp.eq.f32.partialorder %v1262, inf
    %v1272 = vsel %vm1271, %v1262, %v1270
    %vm1273 = vcmp.eq.f32.partialorder %v1262, 0.0
    %v1274 = vand.u32 %v1262, 2147483648
    %v1275 = vsel %vm1273, %v1274, %v1272
    %v1276 = vrsqrt.pop %v1263
    %v1277 = vmul.f32 %v1276, %v1263
    %v1278 = vmul.f32 %v1277, %v1276
    %v1279 = vmul.f32 0.5, %v1278
    %v1280 = vsub.f32 1.5, %v1279
    %v1281 = vmul.f32 %v1276, %v1280
    %v1282 = vmul.f32 %v1263, %v1281
    %vm1283 = vcmp.eq.f32.partialorder %v1263, inf
    %v1284 = vsel %vm1283, %v1263, %v1282
    %vm1285 = vcmp.eq.f32.partialorder %v1263, 0.0
    %v1286 = vand.u32 %v1263, 2147483648
    %v1287 = vsel %vm1285, %v1286, %v1284
    %v1288 = vrcp.pop %v1275
    %v1289 = vmul.f32 %v1275, %v1288
    %v1290 = vsub.f32 1.0, %v1289
    %v1291 = vmul.f32 %v1288, %v1290
    %v1292 = vadd.f32 %v1288, %v1291
    %vm1293 = vweird.f32 %v1275
    %vm1294 = vweird.f32 %v1288
    %vm1295 = vmor %vm1293, %vm1294
    %v1296 = vsel %vm1295, %v1288, %v1292
    %v1297 = vand.u32 2147483647, %v1275
    %vm1298 = vcmp.eq.f32.partialorder %v1297, 8.507059e+37
    %v1299 = vand.u32 %v1275, 2147483648
    %v1300 = vor.u32 1.1754944e-38, %v1299
    %v1301 = vsel %vm1298, %v1300, %v1296
    %v1302 = vmul.f32 %v1250, %v1301
    %v1303 = vrcp.pop %v1287
    %v1304 = vmul.f32 %v1287, %v1303
    %v1305 = vsub.f32 1.0, %v1304
    %v1306 = vmul.f32 %v1303, %v1305
    %v1307 = vadd.f32 %v1303, %v1306
    %vm1308 = vweird.f32 %v1287
    %vm1309 = vweird.f32 %v1303
    %vm1310 = vmor %vm1308, %vm1309
    %v1311 = vsel %vm1310, %v1303, %v1307
    %v1312 = vand.u32 2147483647, %v1287
    %vm1313 = vcmp.eq.f32.partialorder %v1312, 8.507059e+37
    %v1314 = vand.u32 %v1287, 2147483648
    %v1315 = vor.u32 1.1754944e-38, %v1314
    %v1316 = vsel %vm1313, %v1315, %v1311
    %v1317 = vmul.f32 %v1251, %v1316
    %v1319 = vperm.slane %v1239, 0
    %v1321 = vmul.f32 %v1302, %v1319
    %v1322 = vmul.f32 %v1317, %v1319
    %v1324 = vperm.slane %v1241, 0
    %v1326 = vadd.f32 %v1321, %v1324
    %v1327 = vadd.f32 %v1322, %v1324
    %s1328 = scalar_lea.vmem %s8, 32
    %v1329 = vld [vmem:[%s1328] sm:$0xff]
    %v1330 = vld [vmem:[%s1328 + $0x8] sm:$0xff]
    %v1331 = vld [vmem:[%s1328 + $0x10] sm:$0xff]
    %v1332 = vld [vmem:[%s1328 + $0x18] sm:$0xff]
    %s1333 = scalar_lea.vmem %s9, 1
    %v1334 = vld [vmem:[%s1333] sm:$0x1]
    %v1336 = vperm.slane %v1334, 0
    %v1339 = vsel %vm121, %v1326, 0
    %v1342 = vsel %vm121, %v1327, 0
    %1344 = vmatpush.msra.mxu0 0.0
    %1345 = vmatpush.msra.mxu0 0.0
    %1346 = vmatpush.msra.mxu0 0.0
    %1347 = vmatpush.msra.mxu0 0.0
    %1348 = vmatpush.msra.mxu0 0.0
    %1349 = vmatpush.msra.mxu0 0.0
    %1350 = vmatpush.msra.mxu0 0.0
    %1351 = vmatpush.msra.mxu0 0.0
    %1352 = vmatpush.msra.mxu0 0.0
    %1353 = vmatpush.msra.mxu0 0.0
    %1354 = vmatpush.msra.mxu0 0.0
    %1355 = vmatpush.msra.mxu0 0.0
    %1356 = vmatpush.msra.mxu0 %v1332
    %1357 = vmatpush.msra.mxu0 %v1331
    %1358 = vmatpush.msra.mxu0 %v1330
    %1359 = vmatpush.msra.mxu0 %v1329
    %1360 = vmatmul.f32.gmra.mxu0 %v1339
    %v1361 = vpop.f32.mrf.mxu0
    %v1362 = vadd.f32 %v1336, %v1361
    %1363 = vmatmul.f32.gmra.mxu0 %v1342
    %v1364 = vpop.f32.mrf.mxu0
    %v1365 = vadd.f32 %v1336, %v1364
    %1366 = vdwg.mxu0
    %v1367 = vmax.f32 %v1362, 0.0
    %v1368 = vmax.f32 %v1365, 0.0
    %s1369 = scalar_lea.vmem %s10, 64
    %v1370 = vld [vmem:[%s1369] sm:$0xff]
    %v1371 = vld [vmem:[%s1369 + $0x8] sm:$0xff]
    %v1372 = vld [vmem:[%s1369 + $0x10] sm:$0xff]
    %v1373 = vld [vmem:[%s1369 + $0x18] sm:$0xff]
    %v1374 = vld [vmem:[%s1369 + $0x20] sm:$0xff]
    %v1375 = vld [vmem:[%s1369 + $0x28] sm:$0xff]
    %v1376 = vld [vmem:[%s1369 + $0x30] sm:$0xff]
    %v1377 = vld [vmem:[%s1369 + $0x38] sm:$0xff]
    %s1378 = scalar_lea.vmem %s11, 1
    %v1379 = vld [vmem:[%s1378] sm:$0x1]
    %v1381 = vperm.slane %v1379, 0
    %v1384 = vsel %vm511, %v1367, 0
    %v1387 = vsel %vm511, %v1368, 0
    %1389 = vmatpush.msra.mxu0 0.0
    %1390 = vmatpush.msra.mxu0 0.0
    %1391 = vmatpush.msra.mxu0 0.0
    %1392 = vmatpush.msra.mxu0 0.0
    %1393 = vmatpush.msra.mxu0 0.0
    %1394 = vmatpush.msra.mxu0 0.0
    %1395 = vmatpush.msra.mxu0 0.0
    %1396 = vmatpush.msra.mxu0 0.0
    %1397 = vmatpush.msra.mxu0 %v1377
    %1398 = vmatpush.msra.mxu0 %v1376
    %1399 = vmatpush.msra.mxu0 %v1375
    %1400 = vmatpush.msra.mxu0 %v1374
    %1401 = vmatpush.msra.mxu0 %v1373
    %1402 = vmatpush.msra.mxu0 %v1372
    %1403 = vmatpush.msra.mxu0 %v1371
    %1404 = vmatpush.msra.mxu0 %v1370
    %1405 = vmatmul.f32.gmra.mxu0 %v1384
    %v1406 = vpop.f32.mrf.mxu0
    %v1407 = vadd.f32 %v1381, %v1406
    %1408 = vmatmul.f32.gmra.mxu0 %v1387
    %v1409 = vpop.f32.mrf.mxu0
    %v1410 = vadd.f32 %v1381, %v1409
    %1411 = vdwg.mxu0
    %v1412 = vadd.f32 %v1407, %v1326
    %v1413 = vadd.f32 %v1410, %v1327
    %s1414 = scalar_lea.vmem %s12, 1
    %v1415 = vld [vmem:[%s1414] sm:$0x1]
    %s1416 = scalar_lea.vmem %s13, 1
    %v1417 = vld [vmem:[%s1416] sm:$0x1]
    %v1418 = vsel %vm121, %v1412, 0.0
    %1419 = vadd.xlane.f32.xlu0 %v1418
    %v1420 = vpop.xlane.xlu0 %1419
    %v1421 = vsel %vm121, %v1413, 0.0
    %1422 = vadd.xlane.f32.xlu0 %v1421
    %v1423 = vpop.xlane.xlu0 %1422
    %v1424 = vmul.f32 %v1420, %v557
    %v1425 = vmul.f32 %v1423, %v557
    %v1426 = vsub.f32 %v1412, %v1424
    %v1427 = vsub.f32 %v1413, %v1425
    %v1428 = vmul.f32 %v1426, %v1426
    %v1429 = vmul.f32 %v1427, %v1427
    %v1430 = vsel %vm121, %v1428, 0.0
    %1431 = vadd.xlane.f32.xlu0 %v1430
    %v1432 = vpop.xlane.xlu0 %1431
    %v1433 = vsel %vm121, %v1429, 0.0
    %1434 = vadd.xlane.f32.xlu0 %v1433
    %v1435 = vpop.xlane.xlu0 %1434
    %v1436 = vmul.f32 %v1432, %v557
    %v1437 = vmul.f32 %v1435, %v557
    %v1438 = vadd.f32 %v1436, 1e-05
    %v1439 = vadd.f32 %v1437, 1e-05
    %v1440 = vrsqrt.pop %v1438
    %v1441 = vmul.f32 %v1440, %v1438
    %v1442 = vmul.f32 %v1441, %v1440
    %v1443 = vmul.f32 0.5, %v1442
    %v1444 = vsub.f32 1.5, %v1443
    %v1445 = vmul.f32 %v1440, %v1444
    %v1446 = vmul.f32 %v1438, %v1445
    %vm1447 = vcmp.eq.f32.partialorder %v1438, inf
    %v1448 = vsel %vm1447, %v1438, %v1446
    %vm1449 = vcmp.eq.f32.partialorder %v1438, 0.0
    %v1450 = vand.u32 %v1438, 2147483648
    %v1451 = vsel %vm1449, %v1450, %v1448
    %v1452 = vrsqrt.pop %v1439
    %v1453 = vmul.f32 %v1452, %v1439
    %v1454 = vmul.f32 %v1453, %v1452
    %v1455 = vmul.f32 0.5, %v1454
    %v1456 = vsub.f32 1.5, %v1455
    %v1457 = vmul.f32 %v1452, %v1456
    %v1458 = vmul.f32 %v1439, %v1457
    %vm1459 = vcmp.eq.f32.partialorder %v1439, inf
    %v1460 = vsel %vm1459, %v1439, %v1458
    %vm1461 = vcmp.eq.f32.partialorder %v1439, 0.0
    %v1462 = vand.u32 %v1439, 2147483648
    %v1463 = vsel %vm1461, %v1462, %v1460
    %v1464 = vrcp.pop %v1451
    %v1465 = vmul.f32 %v1451, %v1464
    %v1466 = vsub.f32 1.0, %v1465
    %v1467 = vmul.f32 %v1464, %v1466
    %v1468 = vadd.f32 %v1464, %v1467
    %vm1469 = vweird.f32 %v1451
    %vm1470 = vweird.f32 %v1464
    %vm1471 = vmor %vm1469, %vm1470
    %v1472 = vsel %vm1471, %v1464, %v1468
    %v1473 = vand.u32 2147483647, %v1451
    %vm1474 = vcmp.eq.f32.partialorder %v1473, 8.507059e+37
    %v1475 = vand.u32 %v1451, 2147483648
    %v1476 = vor.u32 1.1754944e-38, %v1475
    %v1477 = vsel %vm1474, %v1476, %v1472
    %v1478 = vmul.f32 %v1426, %v1477
    %v1479 = vrcp.pop %v1463
    %v1480 = vmul.f32 %v1463, %v1479
    %v1481 = vsub.f32 1.0, %v1480
    %v1482 = vmul.f32 %v1479, %v1481
    %v1483 = vadd.f32 %v1479, %v1482
    %vm1484 = vweird.f32 %v1463
    %vm1485 = vweird.f32 %v1479
    %vm1486 = vmor %vm1484, %vm1485
    %v1487 = vsel %vm1486, %v1479, %v1483
    %v1488 = vand.u32 2147483647, %v1463
    %vm1489 = vcmp.eq.f32.partialorder %v1488, 8.507059e+37
    %v1490 = vand.u32 %v1463, 2147483648
    %v1491 = vor.u32 1.1754944e-38, %v1490
    %v1492 = vsel %vm1489, %v1491, %v1487
    %v1493 = vmul.f32 %v1427, %v1492
    %v1495 = vperm.slane %v1415, 0
    %v1497 = vmul.f32 %v1478, %v1495
    %v1498 = vmul.f32 %v1493, %v1495
    %v1500 = vperm.slane %v1417, 0
    %v1502 = vadd.f32 %v1497, %v1500
    %v1503 = vadd.f32 %v1498, %v1500
    %v1504 = vmul.f32 %v998, 0.25
    %1505 = vst.msk [vmem:[#allocation6] sm:$0xff] %vm202, %v1504
    %v1506 = vmul.f32 %v1160, 0.25
    %s1507 = scalar_lea.vmem [#allocation6], 8
    %1508 = vst.msk [vmem:[%s1507] sm:$0xff] %vm202, %v1506
    %v1509 = vld [vmem:[%s14] sm:$0x1]
    %v1511 = vsel %vm121, %v1509, 0
    %v1514 = vsel %vm121, %v1502, 0
    %1516 = vmatpush.xpose.msra.mxu0 0.0
    %1517 = vmatpush.xpose.msra.mxu0 0.0
    %1518 = vmatpush.xpose.msra.mxu0 0.0
    %1519 = vmatpush.xpose.msra.mxu0 0.0
    %1520 = vmatpush.xpose.msra.mxu0 0.0
    %1521 = vmatpush.xpose.msra.mxu0 0.0
    %1522 = vmatpush.xpose.msra.mxu0 0.0
    %1523 = vmatpush.xpose.msra.mxu0 0.0
    %1524 = vmatpush.xpose.msra.mxu0 0.0
    %1525 = vmatpush.xpose.msra.mxu0 0.0
    %1526 = vmatpush.xpose.msra.mxu0 0.0
    %1527 = vmatpush.xpose.msra.mxu0 0.0
    %1528 = vmatpush.xpose.msra.mxu0 0.0
    %1529 = vmatpush.xpose.msra.mxu0 0.0
    %1530 = vmatpush.xpose.msra.mxu0 0.0
    %1531 = vmatpush.xpose.msra.mxu0 %v1514
    %1532 = vmatmul.f32.gmra.mxu0 %v1511
    %v1533 = vpop.f32.mrf.mxu0
    %v1534 = vadd.f32 0.0, %v1533
    %1535 = vdwg.mxu0
    %v1536 = vmul.f32 %v1534, 0.17677669
    %vm1537 = vcmask 57344
    %v1538 = vsel %vm1537, %v1536, -inf
    %1539 = vmax.xlane.f32.xlu0 %v1538
    %v1540 = vpop.xlane.xlu0 %1539
    %v1541 = vsub.f32 %v1536, %v1540
    %v1542 = vmul.f32 %v1541, 1.442695
    %v1543 = vpow.pop %v1542
    %v1544 = vsel %vm1537, %v1543, 0.0
    %1545 = vadd.xlane.f32.xlu0 %v1544
    %v1546 = vpop.xlane.xlu0 %1545
    %v1547 = vrcp.pop %v1546
    %v1548 = vmul.f32 %v1546, %v1547
    %v1549 = vsub.f32 1.0, %v1548
    %v1550 = vmul.f32 %v1547, %v1549
    %v1551 = vadd.f32 %v1547, %v1550
    %vm1552 = vweird.f32 %v1546
    %vm1553 = vweird.f32 %v1547
    %vm1554 = vmor %vm1552, %vm1553
    %v1555 = vsel %vm1554, %v1547, %v1551
    %v1556 = vand.u32 2147483647, %v1546
    %vm1557 = vcmp.eq.f32.partialorder %v1556, 8.507059e+37
    %v1558 = vand.u32 %v1546, 2147483648
    %v1559 = vor.u32 1.1754944e-38, %v1558
    %v1560 = vsel %vm1557, %v1559, %v1555
    %v1561 = vmul.f32 %v1543, %v1560
    %v1563 = vsel %vm202, %v1561, 0
    %1565 = vmatpush.msra.mxu0 0.0
    %1566 = vmatpush.msra.mxu0 0.0
    %1567 = vmatpush.msra.mxu0 0.0
    %1568 = vmatpush.msra.mxu0 0.0
    %1569 = vmatpush.msra.mxu0 0.0
    %1570 = vmatpush.msra.mxu0 0.0
    %1571 = vmatpush.msra.mxu0 0.0
    %1572 = vmatpush.msra.mxu0 0.0
    %1573 = vmatpush.msra.mxu0 0.0
    %1574 = vmatpush.msra.mxu0 0.0
    %1575 = vmatpush.msra.mxu0 0.0
    %1576 = vmatpush.msra.mxu0 0.0
    %1577 = vmatpush.msra.mxu0 0.0
    %1578 = vmatpush.msra.mxu0 0.0
    %1579 = vmatpush.msra.mxu0 0.0
    %1580 = vmatpush.msra.mxu0 %v1502
    %1581 = vmatmul.f32.gmra.mxu0 %v1563
    %v1582 = vpop.f32.mrf.mxu0
    %v1583 = vadd.f32 0.0, %v1582
    %1584 = vdwg.mxu0
    %v1586 = vsel %vm121, %v1503, 0
    %1588 = vmatpush.xpose.msra.mxu0 0.0
    %1589 = vmatpush.xpose.msra.mxu0 0.0
    %1590 = vmatpush.xpose.msra.mxu0 0.0
    %1591 = vmatpush.xpose.msra.mxu0 0.0
    %1592 = vmatpush.xpose.msra.mxu0 0.0
    %1593 = vmatpush.xpose.msra.mxu0 0.0
    %1594 = vmatpush.xpose.msra.mxu0 0.0
    %1595 = vmatpush.xpose.msra.mxu0 0.0
    %1596 = vmatpush.xpose.msra.mxu0 0.0
    %1597 = vmatpush.xpose.msra.mxu0 0.0
    %1598 = vmatpush.xpose.msra.mxu0 0.0
    %1599 = vmatpush.xpose.msra.mxu0 0.0
    %1600 = vmatpush.xpose.msra.mxu0 0.0
    %1601 = vmatpush.xpose.msra.mxu0 0.0
    %1602 = vmatpush.xpose.msra.mxu0 0.0
    %1603 = vmatpush.xpose.msra.mxu0 %v1586
    %1604 = vmatmul.f32.gmra.mxu0 %v1511
    %v1605 = vpop.f32.mrf.mxu0
    %v1606 = vadd.f32 0.0, %v1605
    %1607 = vdwg.mxu0
    %v1608 = vmul.f32 %v1606, 0.17677669
    %v1609 = vsel %vm1537, %v1608, -inf
    %1610 = vmax.xlane.f32.xlu0 %v1609
    %v1611 = vpop.xlane.xlu0 %1610
    %v1612 = vsub.f32 %v1608, %v1611
    %v1613 = vmul.f32 %v1612, 1.442695
    %v1614 = vpow.pop %v1613
    %v1615 = vsel %vm1537, %v1614, 0.0
    %1616 = vadd.xlane.f32.xlu0 %v1615
    %v1617 = vpop.xlane.xlu0 %1616
    %v1618 = vrcp.pop %v1617
    %v1619 = vmul.f32 %v1617, %v1618
    %v1620 = vsub.f32 1.0, %v1619
    %v1621 = vmul.f32 %v1618, %v1620
    %v1622 = vadd.f32 %v1618, %v1621
    %vm1623 = vweird.f32 %v1617
    %vm1624 = vweird.f32 %v1618
    %vm1625 = vmor %vm1623, %vm1624
    %v1626 = vsel %vm1625, %v1618, %v1622
    %v1627 = vand.u32 2147483647, %v1617
    %vm1628 = vcmp.eq.f32.partialorder %v1627, 8.507059e+37
    %v1629 = vand.u32 %v1617, 2147483648
    %v1630 = vor.u32 1.1754944e-38, %v1629
    %v1631 = vsel %vm1628, %v1630, %v1626
    %v1632 = vmul.f32 %v1614, %v1631
    %v1634 = vsel %vm202, %v1632, 0
    %1636 = vmatpush.msra.mxu0 0.0
    %1637 = vmatpush.msra.mxu0 0.0
    %1638 = vmatpush.msra.mxu0 0.0
    %1639 = vmatpush.msra.mxu0 0.0
    %1640 = vmatpush.msra.mxu0 0.0
    %1641 = vmatpush.msra.mxu0 0.0
    %1642 = vmatpush.msra.mxu0 0.0
    %1643 = vmatpush.msra.mxu0 0.0
    %1644 = vmatpush.msra.mxu0 0.0
    %1645 = vmatpush.msra.mxu0 0.0
    %1646 = vmatpush.msra.mxu0 0.0
    %1647 = vmatpush.msra.mxu0 0.0
    %1648 = vmatpush.msra.mxu0 0.0
    %1649 = vmatpush.msra.mxu0 0.0
    %1650 = vmatpush.msra.mxu0 0.0
    %1651 = vmatpush.msra.mxu0 %v1503
    %1652 = vmatmul.f32.gmra.mxu0 %v1634
    %v1653 = vpop.f32.mrf.mxu0
    %v1654 = vadd.f32 0.0, %v1653
    %1655 = vdwg.mxu0
    %v1656 = vrot.slane %v1632, 7
    %vm1658 = vcmask 1040384
    %v1659 = vsel %vm1658, %v1561, %v1656
    %vm1660 = vcmask 58368
    %1661 = vst.msk [vmem:[#allocation4] sm:$0x3] %vm1660, %v1659
    %v1663 = vrot.slane %v1654, 7
    %v1665 = vsel %vm1658, %v1583, %v1663
    %v1666 = vld [vmem:[%s15] sm:$0xff]
    %v1667 = vld [vmem:[%s15 + $0x8] sm:$0xff]
    %v1668 = vld [vmem:[%s15 + $0x10] sm:$0xff]
    %v1669 = vld [vmem:[%s15 + $0x18] sm:$0xff]
    %v1670 = vld [vmem:[%s16] sm:$0x1]
    %v1672 = vperm.slane %v1670, 0
    %v1675 = vsel %vm121, %v1665, 0
    %1677 = vmatpush.msra.mxu0 0.0
    %1678 = vmatpush.msra.mxu0 0.0
    %1679 = vmatpush.msra.mxu0 0.0
    %1680 = vmatpush.msra.mxu0 0.0
    %1681 = vmatpush.msra.mxu0 0.0
    %1682 = vmatpush.msra.mxu0 0.0
    %1683 = vmatpush.msra.mxu0 0.0
    %1684 = vmatpush.msra.mxu0 0.0
    %1685 = vmatpush.msra.mxu0 0.0
    %1686 = vmatpush.msra.mxu0 0.0
    %1687 = vmatpush.msra.mxu0 0.0
    %1688 = vmatpush.msra.mxu0 0.0
    %1689 = vmatpush.msra.mxu0 %v1669
    %1690 = vmatpush.msra.mxu0 %v1668
    %1691 = vmatpush.msra.mxu0 %v1667
    %1692 = vmatpush.msra.mxu0 %v1666
    %1693 = vmatmul.f32.gmra.mxu0 %v1675
    %v1694 = vpop.f32.mrf.mxu0
    %v1695 = vadd.f32 %v1672, %v1694
    %1696 = vdwg.mxu0
    %vm1697 = vcmask 9216
    %v1698 = vsel %vm1697, %v1695, -inf
    %1699 = vmax.xlane.f32.xlu0 %v1698
    %v1700 = vpop.xlane.xlu0 %1699
    %v1701 = vsub.f32 %v1695, %v1700
    %v1702 = vmul.f32 %v1701, 1.442695
    %v1703 = vpow.pop %v1702
    %v1704 = vsel %vm1697, %v1703, 0.0
    %1705 = vadd.xlane.f32.xlu0 %v1704
    %v1706 = vpop.xlane.xlu0 %1705
    %v1707 = vlog2.pop %v1706
    %v1708 = vmul.f32 %v1707, 0.6931472
    %v1709 = vadd.f32 %v1700, %v1708
    %v1710 = vsub.f32 %v1695, %v1709
    %1711 = vst.msk [vmem:[#allocation2] sm:$0x3] %vm1697, %v1710
    // Predicated region
    $region70: #{categ_criscas_forward.1} parent=1 // pred_check
      _
    $region71: #{categ_criscas_forward.1} parent=1 // pred_check_branch
      %1713 = sbr.rel (0) target = $region73
    $region72: #{categ_criscas_forward.1} parent=1 // pred_region
      %1715 = vsyncadd [#allocation3], 0
      %s1717 = sshll.u32 [#allocation2], 4
      %s1718 = int_to_ptr.vmem [resolvable:$true] %s1717
      %s1719 = sshll.u32 %s17, 4
      %s1720 = int_to_ptr.hbm [resolvable:$true] %s1719
      %1722 = dma.vmem_to_hbm [thread:$0]  %s1718, 32, %s1720, [#allocation3]
    $region73: #{categ_criscas_forward.1} parent=1 // pred_fallthru
      _
    // Predicated region
    $region74: #{categ_criscas_forward.1} parent=1 // pred_check
      _
    $region75: #{categ_criscas_forward.1} parent=1 // pred_check_branch
      %1724 = sbr.rel (0) target = $region77
    $region76: #{categ_criscas_forward.1} parent=1 // pred_region
      %1726 = vsyncadd [#allocation5], 0
      %s1728 = sshll.u32 [#allocation4], 4
      %s1729 = int_to_ptr.vmem [resolvable:$true] %s1728
      %s1730 = sshll.u32 %s18, 4
      %s1731 = int_to_ptr.hbm [resolvable:$true] %s1730
      %1733 = dma.vmem_to_hbm [thread:$0]  %s1729, 32, %s1731, [#allocation5]
    $region77: #{categ_criscas_forward.1} parent=1 // pred_fallthru
      _
    // Predicated region
    $region78: #{categ_criscas_forward.1} parent=1 // pred_check
      _
    $region79: #{categ_criscas_forward.1} parent=1 // pred_check_branch
      %1735 = sbr.rel (0) target = $region81
    $region80: #{categ_criscas_forward.1} parent=1 // pred_region
      %1737 = vsyncadd [#allocation5], 0
      %s1738 = sshll.u32 [#allocation6], 4
      %s1739 = int_to_ptr.vmem [resolvable:$true] %s1738
      %s1740 = sshll.u32 %s19, 4
      %s1741 = int_to_ptr.hbm [resolvable:$true] %s1740
      %1746 = dma.vmem_to_hbm [thread:$0]  %s1739, 256, %s1741, [#allocation5], 128, 128, 8
    $region81: #{categ_criscas_forward.1} parent=1 // pred_fallthru
      _
    // Predicated region
    $region82: #{categ_criscas_forward.1} parent=1 // pred_check
      _
    $region83: #{categ_criscas_forward.1} parent=1 // pred_check_branch
      %1748 = sbr.rel (0) target = $region85
    $region84: #{categ_criscas_forward.1} parent=1 // pred_region
      %1750 = dma.done [#allocation3], 32
    $region85: #{categ_criscas_forward.1} parent=1 // pred_fallthru
      _
    // Predicated region
    $region86: #{categ_criscas_forward.1} parent=1 // pred_check
      _
    $region87: #{categ_criscas_forward.1} parent=1 // pred_check_branch
      %1752 = sbr.rel (0) target = $region89
    $region88: #{categ_criscas_forward.1} parent=1 // pred_region
      %1754 = dma.done [#allocation5], 32
    $region89: #{categ_criscas_forward.1} parent=1 // pred_fallthru
      _
    // Predicated region
    $region90: #{categ_criscas_forward.1} parent=1 // pred_check
      _
    $region91: #{categ_criscas_forward.1} parent=1 // pred_check_branch
      %1756 = sbr.rel (0) target = $region93
    $region92: #{categ_criscas_forward.1} parent=1 // pred_region
      %1758 = dma.done [#allocation5], 256
    $region93: #{categ_criscas_forward.1} parent=1 // pred_fallthru
      _
    %1759 = vsyncpa [#allocation3], 1
    %1760 = vsyncpa [#allocation5], 1

</llo_original>
